<compile_context>
chip_gen: v7x
topology: tpu7x:2x2x1
jax: 0.10.0
libtpu: 0.0.40
codegen_flags: <defaults>
</compile_context>

<pallas_src>
import functools

import jax
import jax.numpy as jnp
from jax.experimental import pallas as pl
from jax.experimental.pallas import tpu as pltpu


def _round_up(x, m):
    return -(-x // m) * m


def _device_profile():
    """Best-effort TPU-generation detection.

    Returns (block_pair_budget_bytes, scoped_vmem_cap_bytes, multi_core).
    block_pair_budget = target bytes for ONE (input block + output block) pair;
    double-buffering doubles it, so 2*budget stays under the scoped-VMEM cap.
    """
    try:
        kind = jax.devices()[0].device_kind.lower()
    except Exception:
        kind = ""
    # Conservative default (also used for CPU interpret / unknown chips).
    budget, vmem_cap, multi_core = 6 << 20, 16 << 20, False
    if ("v5 lite" in kind) or ("v5e" in kind) or ("v5lite" in kind):
        budget, vmem_cap, multi_core = 6 << 20, 16 << 20, False        # v5e
    elif "v6" in kind:
        budget, vmem_cap, multi_core = 12 << 20, 28 << 20, False       # v6e
    elif "7" in kind:
        budget, vmem_cap, multi_core = 12 << 20, 28 << 20, True        # v7x: 64 MiB phys VMEM, 2 TCs
    elif ("v5p" in kind) or ("v4" in kind):
        budget, vmem_cap, multi_core = 12 << 20, 28 << 20, True        # megacore
    return budget, vmem_cap, multi_core


def _maxpool_rowfused_kernel(x_ref, o_ref, *, ksize, wp, out_w):
    """stride == kernel_size, lane-dense small-W path.

    x_ref block: (tp, th, ksize * wp) -- each sublane "super row" holds the
                 ksize consecutive input rows of one pooling band.
    o_ref block: (tp, th, out_w)
    """
    # H stage: max across the ksize W-wide lane segments, loaded straight from
    # the ref so the full (tp, th, ksize*wp) block value is never kept live.
    hmax = x_ref[:, :, pl.ds(0, wp)]
    for j in range(1, ksize):
        hmax = jnp.maximum(hmax, x_ref[:, :, pl.ds(j * wp, wp)])
    # W stage (stride == kernel, aligned): lane-group reduce over the size-k
    # minor axis -- no lane-strided slicing.
    tp, th, _ = hmax.shape
    o_ref[...] = jnp.max(hmax.reshape(tp, th, out_w, ksize), axis=-1)
    # TODO(synk): a fully lane-dense (planes, out_h*out_w) output slab would
    # make every store unmasked, but needs an in-kernel sublane->lane flatten;
    # only worth it if a bundle dump shows masked vst dominating.


def _maxpool_kernel(x_ref, o_ref, *, ksize, stride, th_out, out_w):
    """General path: sublane-strided H reduce + lane-stage W reduce.

    x_ref block: (tp, th_in, wp);  o_ref block: (tp, th_out, out_w)
    """
    def h_rows(kh):
        # Ref-level (sublane-)strided load: Mosaic issues strided vld directly
        # instead of loading the whole block and relayouting a value slice.
        if stride == 1:
            return x_ref[:, pl.ds(kh, th_out), :]
        return x_ref[:, pl.ds(kh, th_out, stride=stride), :]

    hmax = h_rows(0)
    for kh in range(1, ksize):
        hmax = jnp.maximum(hmax, h_rows(kh))
    tp, _, wp = hmax.shape

    if stride == ksize and wp % ksize == 0:
        # Non-overlapping aligned windows: lane-group reduce, no strided slices.
        o_ref[...] = jnp.max(hmax.reshape(tp, th_out, wp // ksize, ksize), axis=-1)
    else:
        # Overlapping / unaligned windows: ksize lane-strided slices.
        # TODO(synk): if this path gets hot for large k, switch to pltpu.roll
        # (XLU) for the kw offsets + a single subsample at the end.
        w_span = (out_w - 1) * stride + 1
        out = hmax[:, :, 0:w_span:stride]
        for kw in range(1, ksize):
            out = jnp.maximum(out, hmax[:, :, kw:kw + w_span:stride])
        o_ref[...] = out


def max_pool_block_pallas(x_nchw, kernel_size, padding=0, stride=1):
    """Forward of nn.MaxPool2d(kernel_size, stride, padding) on NCHW input."""
    n, c, h, w = x_nchw.shape
    k, s, p = int(kernel_size), int(stride), int(padding)
    if p * 2 > k:
        raise ValueError("padding must be <= kernel_size // 2 (PyTorch MaxPool2d rule)")
    out_h = (h + 2 * p - k) // s + 1
    out_w = (w + 2 * p - k) // s + 1
    planes = n * c

    # Free view, no transpose / no extra HBM pass.
    x3 = x_nchw.reshape(planes, h, w)
    if p > 0:
        # Identity element for max; dtype-min also covers integer dtypes.
        if jnp.issubdtype(x3.dtype, jnp.floating):
            fill = -jnp.inf
        else:
            fill = jnp.iinfo(x3.dtype).min
        x3 = jnp.pad(x3, ((0, 0), (p, p), (p, p)), constant_values=fill)
        # TODO(synk): fold boundary handling into the kernel (iota masks +
        # jnp.where(dtype-min)) to kill this extra HBM pass if padding > 0
        # ever becomes a hot config.
    hp, wp = h + 2 * p, w + 2 * p

    dtype = x3.dtype
    itemsize = jnp.dtype(dtype).itemsize
    sub = max(8, 32 // itemsize)            # sublane multiple: 8 f32 / 16 bf16 / 32 int8
    budget, vmem_cap, multi_core = _device_profile()

    # Lane-dense row-fused layout applies for non-overlapping aligned pooling
    # on narrow planes (the shipped 16x16 config).
    row_fused = (s == k) and (wp % k == 0) and (hp % k == 0) and (wp < 128)

    # ---- H tiling (output rows per block); halo-free only when s == k;
    # dtype-aware candidates, exact divisors so every block stays in bounds. ----
    th_out = out_h
    if s == k and out_h >= 128:
        for cand in (256, 128, 64, 32, 16, 8):
            if cand % sub == 0 and out_h % cand == 0:
                th_out = cand
                break
    grid_h = out_h // th_out

    if row_fused:
        x_in = x3.reshape(planes, hp // k, k * wp)      # free view (row-major)
        in_rows, in_cols = th_out, k * wp
    else:
        x_in = x3
        in_rows = hp if th_out == out_h else th_out * s
        in_cols = wp

    # ---- Plane tiling: padded-footprint VMEM estimate, ragged cdiv grid. ----
    plane_bytes = (_round_up(in_rows, sub) * _round_up(in_cols, 128) +
                   _round_up(th_out, sub) * _round_up(out_w, 128)) * itemsize
    tp = max(1, min(planes, budget // max(plane_bytes, 1)))
    grid_p = pl.cdiv(planes, tp)
    if multi_core and planes >= 2 and grid_p * grid_h < 2:
        # Give the second TensorCore something to do on megacore parts.
        tp = pl.cdiv(planes, 2)
        grid_p = pl.cdiv(planes, tp)

    # Explicit scoped-VMEM limit: double-buffered in+out blocks plus margin.
    vmem_limit = int(max(vmem_cap, 2 * tp * plane_bytes + (2 << 20)))

    out_elems = planes * out_h * out_w
    cost = pl.CostEstimate(
        flops=2 * (2 * k - 1) * out_elems,      # separable pooling compare count
        transcendentals=0,
        bytes_accessed=(planes * hp * wp + out_elems) * itemsize,
    )

    if row_fused:
        kernel = functools.partial(_maxpool_rowfused_kernel,
                                   ksize=k, wp=wp, out_w=out_w)
        in_spec = pl.BlockSpec((tp, th_out, k * wp), lambda ip, ih: (ip, ih, 0))
    else:
        kernel = functools.partial(_maxpool_kernel,
                                   ksize=k, stride=s, th_out=th_out, out_w=out_w)
        in_spec = pl.BlockSpec((tp, in_rows, wp), lambda ip, ih: (ip, ih, 0))

    out3 = pl.pallas_call(
        kernel,
        out_shape=jax.ShapeDtypeStruct((planes, out_h, out_w), dtype),
        grid_spec=pltpu.PrefetchScalarGridSpec(
            num_scalar_prefetch=0,
            grid=(grid_p, grid_h),
            in_specs=[in_spec],
            out_specs=pl.BlockSpec((tp, th_out, out_w), lambda ip, ih: (ip, ih, 0)),
        ),
        compiler_params=pltpu.CompilerParams(
            dimension_semantics=("parallel", "parallel"),
            vmem_limit_bytes=vmem_limit),
        cost_estimate=cost,
    )(x_in)

    # Free view back to NCHW.
    return out3.reshape(n, c, out_h, out_w)


def _reference_maxpool(x_nchw, kernel_size, padding, stride):
    # Plain-JAX reference (reduce_window) for correctness checking.
    return jax.lax.reduce_window(
        x_nchw,
        -jnp.inf,
        jax.lax.max,
        window_dimensions=(1, 1, kernel_size, kernel_size),
        window_strides=(1, 1, stride, stride),
        padding=((0, 0), (0, 0), (padding, padding), (padding, padding)),
    )


if __name__ == "__main__":
    # Module config: in_channels=4, in_h=16, in_w=16, kernel_size=2, padding=0, stride=2
    in_channels, in_h, in_w = 4, 16, 16
    kernel_size, padding, stride = 2, 0, 2
    batch = 2

    key = jax.random.PRNGKey(0)
    x = jax.random.normal(key, (batch, in_channels, in_h, in_w), dtype=jnp.float32)

    out = max_pool_block_pallas(x, kernel_size, padding=padding, stride=stride)
    out = jax.block_until_ready(out)

    ref = _reference_maxpool(x, kernel_size, padding, stride)
    assert out.shape == ref.shape, (out.shape, ref.shape)
    assert jnp.allclose(out, ref), "Pallas maxpool mismatch vs reference"

    print("KERNEL_OK")
</pallas_src>

<mosaic_0001>
module attributes {stable_mosaic.version = 11 : i64} {
  func.func @_maxpool_rowfused_kernel(%arg0: i32, %arg1: i32, %arg2: memref<8x8x32xf32, #tpu.memory_space<vmem>>, %arg3: memref<8x8x8xf32, #tpu.memory_space<vmem>>) attributes {dimension_semantics = [#tpu.dimension_semantics<parallel>, #tpu.dimension_semantics<parallel>], iteration_bounds = array<i64: 1, 1>, scalar_prefetch = 0 : i64, scratch_operands = 0 : i64, tpu.core_type = #tpu.core_type<tc>, window_params = [{transform_indices = @transform_0, window_bounds = array<i64: 8, 8, 32>}, {transform_indices = @transform_1, window_bounds = array<i64: 8, 8, 8>}]} {
    %c0 = arith.constant 0 : index
    %c0_0 = arith.constant 0 : index
    %c0_1 = arith.constant 0 : index
    %0 = vector.load %arg2[%c0, %c0_0, %c0_1] : memref<8x8x32xf32, #tpu.memory_space<vmem>>, vector<8x8x16xf32>
    %c0_2 = arith.constant 0 : index
    %c0_3 = arith.constant 0 : index
    %c16 = arith.constant 16 : index
    %1 = vector.load %arg2[%c0_2, %c0_3, %c16] : memref<8x8x32xf32, #tpu.memory_space<vmem>>, vector<8x8x16xf32>
    %2 = arith.maximumf %0, %1 : vector<8x8x16xf32>
    %3 = vector.shape_cast %2 : vector<8x8x16xf32> to vector<8x8x8x2xf32>
    %cst = arith.constant dense<0xFF800000> : vector<8x8x8xf32>
    %4 = vector.multi_reduction <maximumf>, %3, %cst [3] : vector<8x8x8x2xf32> to vector<8x8x8xf32>
    %c0_4 = arith.constant 0 : index
    %c0_5 = arith.constant 0 : index
    %c0_6 = arith.constant 0 : index
    %5 = vector.load %arg3[%c0_4, %c0_5, %c0_6] : memref<8x8x8xf32, #tpu.memory_space<vmem>>, vector<8x8x8xf32>
    tpu.vector_store %arg3[%c0_4, %c0_5, %c0_6], %4 {strides = array<i32>} : memref<8x8x8xf32, #tpu.memory_space<vmem>>, vector<8x8x8xf32>,
    return
  }
  func.func @transform_0(%arg0: i32, %arg1: i32) -> (i32, i32, i32) {
    %c0_i32 = arith.constant 0 : i32
    %c0_i32_0 = arith.constant 0 : i32
    return %arg0, %arg1, %c0_i32 : i32, i32, i32
  }
  func.func @transform_1(%arg0: i32, %arg1: i32) -> (i32, i32, i32) {
    %c0_i32 = arith.constant 0 : i32
    %c0_i32_0 = arith.constant 0 : i32
    return %arg0, %arg1, %c0_i32 : i32, i32, i32
  }
}

</mosaic_0001>

<llo_original>
// kernel: tpu_custom_call.1
$region0: #{tpu_custom_call.1}
  #allocation0 [shape = 'u32[]', space=smem, size = 0x4, offset = 0x4, fixed_abs, tag = 'smem constant byte address 0x4 - core index']
  #allocation1 [shape = 'u32[144,128]{1,0:T(1,128)}', space=vmem, size = 0x12000, scoped, tag = 'internal scratch']
  %s0 = inlined_call_operand.hbm [shape: f32[8,8,32], index: 0, kind: input, shape index: {}]
  %s1 = inlined_call_operand.hbm [shape: f32[8,8,8], index: 1, kind: output, shape index: {}]
  %s2 = sld [smem:[#allocation0]]
  $region18: #{tpu_custom_call.1} parent=0
    _
  %s4 = ssub.s32 1, %s2
  %s5 = scalar_select 0, %s4, %s2
  $region1: #{tpu_custom_call.1} parent=0
    #allocation2 [shape = 'u8[32768]{0}', space=vmem, size = 0x8000, scoped, tag = 'input window, operand 0, single buffered']
    #allocation3 [shape = 's32[1]{0}', space=sflag, size = 0x4, scoped, tag = 'scoped memory for tpu_custom_call.1']
    #allocation4 [shape = 's32[1]{0}', space=sflag, size = 0x4, scoped, tag = 'scoped memory for tpu_custom_call.1']
    #allocation5 [shape = 'u8[32768]{0}', space=vmem, size = 0x8000, scoped, tag = 'output window, operand 0, single buffered']
    %6 = vsyncpa [#allocation3], 0
    %7 = vsyncpa [#allocation4], 0
    // Predicated region
    $region2: #{tpu_custom_call.1} parent=1 // pred_check
      _
    $region3: #{tpu_custom_call.1} parent=1 // pred_check_branch
      %9 = sbr.rel (0) target = $region5
    $region4: #{tpu_custom_call.1} parent=1 // pred_region
      %s11 = ssub.s32 1024, 1024
      %12 = vsyncadd [#allocation3], %s11
      %s13 = sshll.u32 [#allocation2], 4
      %s14 = int_to_ptr.vmem [resolvable:$true] %s13
      %19 = dma.hbm_to_vmem [thread:$0]  %s0, 1024, %s14, [#allocation3], 128, 128, 8
    $region5: #{tpu_custom_call.1} parent=1 // pred_fallthru
      _
    // Predicated region
    $region6: #{tpu_custom_call.1} parent=1 // pred_check
      _
    $region7: #{tpu_custom_call.1} parent=1 // pred_check_branch
      %21 = sbr.rel (0) target = $region9
    $region8: #{tpu_custom_call.1} parent=1 // pred_region
      %22 = dma.done [#allocation3], 1024
    $region9: #{tpu_custom_call.1} parent=1 // pred_fallthru
      _
    %v23 = vld [vmem:[#allocation2] sm:$0xff]
    %v24 = vld [vmem:[#allocation2 + $0x8] sm:$0xff]
    %v25 = vld [vmem:[#allocation2 + $0x10] sm:$0xff]
    %v26 = vld [vmem:[#allocation2 + $0x18] sm:$0xff]
    %v27 = vld [vmem:[#allocation2 + $0x20] sm:$0xff]
    %v28 = vld [vmem:[#allocation2 + $0x28] sm:$0xff]
    %v29 = vld [vmem:[#allocation2 + $0x30] sm:$0xff]
    %v30 = vld [vmem:[#allocation2 + $0x38] sm:$0xff]
    %39 = vrot.lane.b32.xlu0 %v23, 112
    %v40 = vpop.permute.xlu0 %39
    %41 = vrot.lane.b32.xlu0 %v24, 112
    %v42 = vpop.permute.xlu0 %41
    %43 = vrot.lane.b32.xlu0 %v25, 112
    %v44 = vpop.permute.xlu0 %43
    %45 = vrot.lane.b32.xlu0 %v26, 112
    %v46 = vpop.permute.xlu0 %45
    %47 = vrot.lane.b32.xlu0 %v27, 112
    %v48 = vpop.permute.xlu0 %47
    %49 = vrot.lane.b32.xlu0 %v28, 112
    %v50 = vpop.permute.xlu0 %49
    %51 = vrot.lane.b32.xlu0 %v29, 112
    %v52 = vpop.permute.xlu0 %51
    %53 = vrot.lane.b32.xlu0 %v30, 112
    %v54 = vpop.permute.xlu0 %53
    %v63 = vmax.f32 %v23, %v40
    %v64 = vmax.f32 %v24, %v42
    %v65 = vmax.f32 %v25, %v44
    %v66 = vmax.f32 %v26, %v46
    %v67 = vmax.f32 %v27, %v48
    %v68 = vmax.f32 %v28, %v50
    %v69 = vmax.f32 %v29, %v52
    %v70 = vmax.f32 %v30, %v54
    %79 = vrot.lane.b32.xlu0 %v63, 126
    %v80 = vpop.permute.xlu0 %79
    %81 = vrot.lane.b32.xlu0 %v64, 126
    %v82 = vpop.permute.xlu0 %81
    %83 = vrot.lane.b32.xlu0 %v65, 126
    %v84 = vpop.permute.xlu0 %83
    %85 = vrot.lane.b32.xlu0 %v66, 126
    %v86 = vpop.permute.xlu0 %85
    %87 = vrot.lane.b32.xlu0 %v67, 126
    %v88 = vpop.permute.xlu0 %87
    %89 = vrot.lane.b32.xlu0 %v68, 126
    %v90 = vpop.permute.xlu0 %89
    %91 = vrot.lane.b32.xlu0 %v69, 126
    %v92 = vpop.permute.xlu0 %91
    %93 = vrot.lane.b32.xlu0 %v70, 126
    %v94 = vpop.permute.xlu0 %93
    %103 = vrot.lane.b32.xlu0 %v63, 124
    %v104 = vpop.permute.xlu0 %103
    %105 = vrot.lane.b32.xlu0 %v64, 124
    %v106 = vpop.permute.xlu0 %105
    %107 = vrot.lane.b32.xlu0 %v65, 124
    %v108 = vpop.permute.xlu0 %107
    %109 = vrot.lane.b32.xlu0 %v66, 124
    %v110 = vpop.permute.xlu0 %109
    %111 = vrot.lane.b32.xlu0 %v67, 124
    %v112 = vpop.permute.xlu0 %111
    %113 = vrot.lane.b32.xlu0 %v68, 124
    %v114 = vpop.permute.xlu0 %113
    %115 = vrot.lane.b32.xlu0 %v69, 124
    %v116 = vpop.permute.xlu0 %115
    %117 = vrot.lane.b32.xlu0 %v70, 124
    %v118 = vpop.permute.xlu0 %117
    %127 = vrot.lane.b32.xlu0 %v63, 122
    %v128 = vpop.permute.xlu0 %127
    %129 = vrot.lane.b32.xlu0 %v64, 122
    %v130 = vpop.permute.xlu0 %129
    %131 = vrot.lane.b32.xlu0 %v65, 122
    %v132 = vpop.permute.xlu0 %131
    %133 = vrot.lane.b32.xlu0 %v66, 122
    %v134 = vpop.permute.xlu0 %133
    %135 = vrot.lane.b32.xlu0 %v67, 122
    %v136 = vpop.permute.xlu0 %135
    %137 = vrot.lane.b32.xlu0 %v68, 122
    %v138 = vpop.permute.xlu0 %137
    %139 = vrot.lane.b32.xlu0 %v69, 122
    %v140 = vpop.permute.xlu0 %139
    %141 = vrot.lane.b32.xlu0 %v70, 122
    %v142 = vpop.permute.xlu0 %141
    %151 = vrot.lane.b32.xlu0 %v63, 120
    %v152 = vpop.permute.xlu0 %151
    %153 = vrot.lane.b32.xlu0 %v64, 120
    %v154 = vpop.permute.xlu0 %153
    %155 = vrot.lane.b32.xlu0 %v65, 120
    %v156 = vpop.permute.xlu0 %155
    %157 = vrot.lane.b32.xlu0 %v66, 120
    %v158 = vpop.permute.xlu0 %157
    %159 = vrot.lane.b32.xlu0 %v67, 120
    %v160 = vpop.permute.xlu0 %159
    %161 = vrot.lane.b32.xlu0 %v68, 120
    %v162 = vpop.permute.xlu0 %161
    %163 = vrot.lane.b32.xlu0 %v69, 120
    %v164 = vpop.permute.xlu0 %163
    %165 = vrot.lane.b32.xlu0 %v70, 120
    %v166 = vpop.permute.xlu0 %165
    %175 = vrot.lane.b32.xlu0 %v63, 118
    %v176 = vpop.permute.xlu0 %175
    %177 = vrot.lane.b32.xlu0 %v64, 118
    %v178 = vpop.permute.xlu0 %177
    %179 = vrot.lane.b32.xlu0 %v65, 118
    %v180 = vpop.permute.xlu0 %179
    %181 = vrot.lane.b32.xlu0 %v66, 118
    %v182 = vpop.permute.xlu0 %181
    %183 = vrot.lane.b32.xlu0 %v67, 118
    %v184 = vpop.permute.xlu0 %183
    %185 = vrot.lane.b32.xlu0 %v68, 118
    %v186 = vpop.permute.xlu0 %185
    %187 = vrot.lane.b32.xlu0 %v69, 118
    %v188 = vpop.permute.xlu0 %187
    %189 = vrot.lane.b32.xlu0 %v70, 118
    %v190 = vpop.permute.xlu0 %189
    %199 = vrot.lane.b32.xlu0 %v63, 116
    %v200 = vpop.permute.xlu0 %199
    %201 = vrot.lane.b32.xlu0 %v64, 116
    %v202 = vpop.permute.xlu0 %201
    %203 = vrot.lane.b32.xlu0 %v65, 116
    %v204 = vpop.permute.xlu0 %203
    %205 = vrot.lane.b32.xlu0 %v66, 116
    %v206 = vpop.permute.xlu0 %205
    %207 = vrot.lane.b32.xlu0 %v67, 116
    %v208 = vpop.permute.xlu0 %207
    %209 = vrot.lane.b32.xlu0 %v68, 116
    %v210 = vpop.permute.xlu0 %209
    %211 = vrot.lane.b32.xlu0 %v69, 116
    %v212 = vpop.permute.xlu0 %211
    %213 = vrot.lane.b32.xlu0 %v70, 116
    %v214 = vpop.permute.xlu0 %213
    %223 = vrot.lane.b32.xlu0 %v63, 114
    %v224 = vpop.permute.xlu0 %223
    %225 = vrot.lane.b32.xlu0 %v64, 114
    %v226 = vpop.permute.xlu0 %225
    %227 = vrot.lane.b32.xlu0 %v65, 114
    %v228 = vpop.permute.xlu0 %227
    %229 = vrot.lane.b32.xlu0 %v66, 114
    %v230 = vpop.permute.xlu0 %229
    %231 = vrot.lane.b32.xlu0 %v67, 114
    %v232 = vpop.permute.xlu0 %231
    %233 = vrot.lane.b32.xlu0 %v68, 114
    %v234 = vpop.permute.xlu0 %233
    %235 = vrot.lane.b32.xlu0 %v69, 114
    %v236 = vpop.permute.xlu0 %235
    %237 = vrot.lane.b32.xlu0 %v70, 114
    %v238 = vpop.permute.xlu0 %237
    %v247 = vcombine.low %v63, %v104
    %v248 = vcombine.high %v63, %v104
    %v250 = vunpack.c.l.s4 1983009808
    %v251 = vunpack.c.0.s8 %v250
    %v252 = vlaneseq
    %v253 = vshrl.u32 %v252, 7
    %v254 = vsub.s32 %v251, %v253
    %v255 = vrot.slane %v247, %v254
    %v257 = vunpack.c.l.s4 1983009808
    %v258 = vunpack.c.0.s8 %v257
    %v259 = vlaneseq
    %v260 = vshrl.u32 %v259, 7
    %v261 = vsub.s32 %v258, %v260
    %v262 = vrot.slane %v248, %v261
    %v263 = vcombine.low %v80, %v128
    %v264 = vcombine.high %v80, %v128
    %v266 = vunpack.c.l.s4 1983009808
    %v267 = vunpack.c.0.s8 %v266
    %v268 = vlaneseq
    %v269 = vshrl.u32 %v268, 7
    %v270 = vsub.s32 %v267, %v269
    %v271 = vrot.slane %v263, %v270
    %v273 = vunpack.c.l.s4 1983009808
    %v274 = vunpack.c.0.s8 %v273
    %v275 = vlaneseq
    %v276 = vshrl.u32 %v275, 7
    %v277 = vsub.s32 %v274, %v276
    %v278 = vrot.slane %v264, %v277
    %v279 = vcombine.low %v152, %v200
    %v280 = vcombine.high %v152, %v200
    %v282 = vunpack.c.l.s4 1983009808
    %v283 = vunpack.c.0.s8 %v282
    %v284 = vlaneseq
    %v285 = vshrl.u32 %v284, 7
    %v286 = vsub.s32 %v283, %v285
    %v287 = vrot.slane %v279, %v286
    %v289 = vunpack.c.l.s4 1983009808
    %v290 = vunpack.c.0.s8 %v289
    %v291 = vlaneseq
    %v292 = vshrl.u32 %v291, 7
    %v293 = vsub.s32 %v290, %v292
    %v294 = vrot.slane %v280, %v293
    %v295 = vcombine.low %v176, %v224
    %v296 = vcombine.high %v176, %v224
    %v298 = vunpack.c.l.s4 1983009808
    %v299 = vunpack.c.0.s8 %v298
    %v300 = vlaneseq
    %v301 = vshrl.u32 %v300, 7
    %v302 = vsub.s32 %v299, %v301
    %v303 = vrot.slane %v295, %v302
    %v305 = vunpack.c.l.s4 1983009808
    %v306 = vunpack.c.0.s8 %v305
    %v307 = vlaneseq
    %v308 = vshrl.u32 %v307, 7
    %v309 = vsub.s32 %v306, %v308
    %v310 = vrot.slane %v296, %v309
    %v311 = vcombine.low %v255, %v271
    %v312 = vcombine.high %v255, %v271
    %v314 = vunpack.c.l.s4 1934713408
    %v315 = vunpack.c.0.s8 %v314
    %v316 = vlaneseq
    %v317 = vshrl.u32 %v316, 7
    %v318 = vsub.s32 %v315, %v317
    %v319 = vrot.slane %v311, %v318
    %v321 = vunpack.c.l.s4 1934713408
    %v322 = vunpack.c.0.s8 %v321
    %v323 = vlaneseq
    %v324 = vshrl.u32 %v323, 7
    %v325 = vsub.s32 %v322, %v324
    %v326 = vrot.slane %v312, %v325
    %v327 = vcombine.low %v262, %v278
    %v328 = vcombine.high %v262, %v278
    %v330 = vunpack.c.l.s4 1934713408
    %v331 = vunpack.c.0.s8 %v330
    %v332 = vlaneseq
    %v333 = vshrl.u32 %v332, 7
    %v334 = vsub.s32 %v331, %v333
    %v335 = vrot.slane %v327, %v334
    %v337 = vunpack.c.l.s4 1934713408
    %v338 = vunpack.c.0.s8 %v337
    %v339 = vlaneseq
    %v340 = vshrl.u32 %v339, 7
    %v341 = vsub.s32 %v338, %v340
    %v342 = vrot.slane %v328, %v341
    %v343 = vcombine.low %v287, %v303
    %v344 = vcombine.high %v287, %v303
    %v346 = vunpack.c.l.s4 1934713408
    %v347 = vunpack.c.0.s8 %v346
    %v348 = vlaneseq
    %v349 = vshrl.u32 %v348, 7
    %v350 = vsub.s32 %v347, %v349
    %v351 = vrot.slane %v343, %v350
    %v353 = vunpack.c.l.s4 1934713408
    %v354 = vunpack.c.0.s8 %v353
    %v355 = vlaneseq
    %v356 = vshrl.u32 %v355, 7
    %v357 = vsub.s32 %v354, %v356
    %v358 = vrot.slane %v344, %v357
    %v359 = vcombine.low %v294, %v310
    %v360 = vcombine.high %v294, %v310
    %v362 = vunpack.c.l.s4 1934713408
    %v363 = vunpack.c.0.s8 %v362
    %v364 = vlaneseq
    %v365 = vshrl.u32 %v364, 7
    %v366 = vsub.s32 %v363, %v365
    %v367 = vrot.slane %v359, %v366
    %v369 = vunpack.c.l.s4 1934713408
    %v370 = vunpack.c.0.s8 %v369
    %v371 = vlaneseq
    %v372 = vshrl.u32 %v371, 7
    %v373 = vsub.s32 %v370, %v372
    %v374 = vrot.slane %v360, %v373
    %v375 = vcombine.low %v319, %v351
    %v376 = vcombine.high %v319, %v351
    %v377 = vcombine.low %v326, %v358
    %v378 = vcombine.high %v326, %v358
    %v379 = vcombine.low %v335, %v367
    %v380 = vcombine.high %v335, %v367
    %v381 = vcombine.low %v342, %v374
    %v382 = vcombine.high %v342, %v374
    %v383 = vcombine.low %v64, %v106
    %v384 = vcombine.high %v64, %v106
    %v386 = vunpack.c.l.s4 1983009808
    %v387 = vunpack.c.0.s8 %v386
    %v388 = vlaneseq
    %v389 = vshrl.u32 %v388, 7
    %v390 = vsub.s32 %v387, %v389
    %v391 = vrot.slane %v383, %v390
    %v393 = vunpack.c.l.s4 1983009808
    %v394 = vunpack.c.0.s8 %v393
    %v395 = vlaneseq
    %v396 = vshrl.u32 %v395, 7
    %v397 = vsub.s32 %v394, %v396
    %v398 = vrot.slane %v384, %v397
    %v399 = vcombine.low %v82, %v130
    %v400 = vcombine.high %v82, %v130
    %v402 = vunpack.c.l.s4 1983009808
    %v403 = vunpack.c.0.s8 %v402
    %v404 = vlaneseq
    %v405 = vshrl.u32 %v404, 7
    %v406 = vsub.s32 %v403, %v405
    %v407 = vrot.slane %v399, %v406
    %v409 = vunpack.c.l.s4 1983009808
    %v410 = vunpack.c.0.s8 %v409
    %v411 = vlaneseq
    %v412 = vshrl.u32 %v411, 7
    %v413 = vsub.s32 %v410, %v412
    %v414 = vrot.slane %v400, %v413
    %v415 = vcombine.low %v154, %v202
    %v416 = vcombine.high %v154, %v202
    %v418 = vunpack.c.l.s4 1983009808
    %v419 = vunpack.c.0.s8 %v418
    %v420 = vlaneseq
    %v421 = vshrl.u32 %v420, 7
    %v422 = vsub.s32 %v419, %v421
    %v423 = vrot.slane %v415, %v422
    %v425 = vunpack.c.l.s4 1983009808
    %v426 = vunpack.c.0.s8 %v425
    %v427 = vlaneseq
    %v428 = vshrl.u32 %v427, 7
    %v429 = vsub.s32 %v426, %v428
    %v430 = vrot.slane %v416, %v429
    %v431 = vcombine.low %v178, %v226
    %v432 = vcombine.high %v178, %v226
    %v434 = vunpack.c.l.s4 1983009808
    %v435 = vunpack.c.0.s8 %v434
    %v436 = vlaneseq
    %v437 = vshrl.u32 %v436, 7
    %v438 = vsub.s32 %v435, %v437
    %v439 = vrot.slane %v431, %v438
    %v441 = vunpack.c.l.s4 1983009808
    %v442 = vunpack.c.0.s8 %v441
    %v443 = vlaneseq
    %v444 = vshrl.u32 %v443, 7
    %v445 = vsub.s32 %v442, %v444
    %v446 = vrot.slane %v432, %v445
    %v447 = vcombine.low %v391, %v407
    %v448 = vcombine.high %v391, %v407
    %v450 = vunpack.c.l.s4 1934713408
    %v451 = vunpack.c.0.s8 %v450
    %v452 = vlaneseq
    %v453 = vshrl.u32 %v452, 7
    %v454 = vsub.s32 %v451, %v453
    %v455 = vrot.slane %v447, %v454
    %v457 = vunpack.c.l.s4 1934713408
    %v458 = vunpack.c.0.s8 %v457
    %v459 = vlaneseq
    %v460 = vshrl.u32 %v459, 7
    %v461 = vsub.s32 %v458, %v460
    %v462 = vrot.slane %v448, %v461
    %v463 = vcombine.low %v398, %v414
    %v464 = vcombine.high %v398, %v414
    %v466 = vunpack.c.l.s4 1934713408
    %v467 = vunpack.c.0.s8 %v466
    %v468 = vlaneseq
    %v469 = vshrl.u32 %v468, 7
    %v470 = vsub.s32 %v467, %v469
    %v471 = vrot.slane %v463, %v470
    %v473 = vunpack.c.l.s4 1934713408
    %v474 = vunpack.c.0.s8 %v473
    %v475 = vlaneseq
    %v476 = vshrl.u32 %v475, 7
    %v477 = vsub.s32 %v474, %v476
    %v478 = vrot.slane %v464, %v477
    %v479 = vcombine.low %v423, %v439
    %v480 = vcombine.high %v423, %v439
    %v482 = vunpack.c.l.s4 1934713408
    %v483 = vunpack.c.0.s8 %v482
    %v484 = vlaneseq
    %v485 = vshrl.u32 %v484, 7
    %v486 = vsub.s32 %v483, %v485
    %v487 = vrot.slane %v479, %v486
    %v489 = vunpack.c.l.s4 1934713408
    %v490 = vunpack.c.0.s8 %v489
    %v491 = vlaneseq
    %v492 = vshrl.u32 %v491, 7
    %v493 = vsub.s32 %v490, %v492
    %v494 = vrot.slane %v480, %v493
    %v495 = vcombine.low %v430, %v446
    %v496 = vcombine.high %v430, %v446
    %v498 = vunpack.c.l.s4 1934713408
    %v499 = vunpack.c.0.s8 %v498
    %v500 = vlaneseq
    %v501 = vshrl.u32 %v500, 7
    %v502 = vsub.s32 %v499, %v501
    %v503 = vrot.slane %v495, %v502
    %v505 = vunpack.c.l.s4 1934713408
    %v506 = vunpack.c.0.s8 %v505
    %v507 = vlaneseq
    %v508 = vshrl.u32 %v507, 7
    %v509 = vsub.s32 %v506, %v508
    %v510 = vrot.slane %v496, %v509
    %v511 = vcombine.low %v455, %v487
    %v512 = vcombine.high %v455, %v487
    %v513 = vcombine.low %v462, %v494
    %v514 = vcombine.high %v462, %v494
    %v515 = vcombine.low %v471, %v503
    %v516 = vcombine.high %v471, %v503
    %v517 = vcombine.low %v478, %v510
    %v518 = vcombine.high %v478, %v510
    %v519 = vcombine.low %v65, %v108
    %v520 = vcombine.high %v65, %v108
    %v522 = vunpack.c.l.s4 1983009808
    %v523 = vunpack.c.0.s8 %v522
    %v524 = vlaneseq
    %v525 = vshrl.u32 %v524, 7
    %v526 = vsub.s32 %v523, %v525
    %v527 = vrot.slane %v519, %v526
    %v529 = vunpack.c.l.s4 1983009808
    %v530 = vunpack.c.0.s8 %v529
    %v531 = vlaneseq
    %v532 = vshrl.u32 %v531, 7
    %v533 = vsub.s32 %v530, %v532
    %v534 = vrot.slane %v520, %v533
    %v535 = vcombine.low %v84, %v132
    %v536 = vcombine.high %v84, %v132
    %v538 = vunpack.c.l.s4 1983009808
    %v539 = vunpack.c.0.s8 %v538
    %v540 = vlaneseq
    %v541 = vshrl.u32 %v540, 7
    %v542 = vsub.s32 %v539, %v541
    %v543 = vrot.slane %v535, %v542
    %v545 = vunpack.c.l.s4 1983009808
    %v546 = vunpack.c.0.s8 %v545
    %v547 = vlaneseq
    %v548 = vshrl.u32 %v547, 7
    %v549 = vsub.s32 %v546, %v548
    %v550 = vrot.slane %v536, %v549
    %v551 = vcombine.low %v156, %v204
    %v552 = vcombine.high %v156, %v204
    %v554 = vunpack.c.l.s4 1983009808
    %v555 = vunpack.c.0.s8 %v554
    %v556 = vlaneseq
    %v557 = vshrl.u32 %v556, 7
    %v558 = vsub.s32 %v555, %v557
    %v559 = vrot.slane %v551, %v558
    %v561 = vunpack.c.l.s4 1983009808
    %v562 = vunpack.c.0.s8 %v561
    %v563 = vlaneseq
    %v564 = vshrl.u32 %v563, 7
    %v565 = vsub.s32 %v562, %v564
    %v566 = vrot.slane %v552, %v565
    %v567 = vcombine.low %v180, %v228
    %v568 = vcombine.high %v180, %v228
    %v570 = vunpack.c.l.s4 1983009808
    %v571 = vunpack.c.0.s8 %v570
    %v572 = vlaneseq
    %v573 = vshrl.u32 %v572, 7
    %v574 = vsub.s32 %v571, %v573
    %v575 = vrot.slane %v567, %v574
    %v577 = vunpack.c.l.s4 1983009808
    %v578 = vunpack.c.0.s8 %v577
    %v579 = vlaneseq
    %v580 = vshrl.u32 %v579, 7
    %v581 = vsub.s32 %v578, %v580
    %v582 = vrot.slane %v568, %v581
    %v583 = vcombine.low %v527, %v543
    %v584 = vcombine.high %v527, %v543
    %v586 = vunpack.c.l.s4 1934713408
    %v587 = vunpack.c.0.s8 %v586
    %v588 = vlaneseq
    %v589 = vshrl.u32 %v588, 7
    %v590 = vsub.s32 %v587, %v589
    %v591 = vrot.slane %v583, %v590
    %v593 = vunpack.c.l.s4 1934713408
    %v594 = vunpack.c.0.s8 %v593
    %v595 = vlaneseq
    %v596 = vshrl.u32 %v595, 7
    %v597 = vsub.s32 %v594, %v596
    %v598 = vrot.slane %v584, %v597
    %v599 = vcombine.low %v534, %v550
    %v600 = vcombine.high %v534, %v550
    %v602 = vunpack.c.l.s4 1934713408
    %v603 = vunpack.c.0.s8 %v602
    %v604 = vlaneseq
    %v605 = vshrl.u32 %v604, 7
    %v606 = vsub.s32 %v603, %v605
    %v607 = vrot.slane %v599, %v606
    %v609 = vunpack.c.l.s4 1934713408
    %v610 = vunpack.c.0.s8 %v609
    %v611 = vlaneseq
    %v612 = vshrl.u32 %v611, 7
    %v613 = vsub.s32 %v610, %v612
    %v614 = vrot.slane %v600, %v613
    %v615 = vcombine.low %v559, %v575
    %v616 = vcombine.high %v559, %v575
    %v618 = vunpack.c.l.s4 1934713408
    %v619 = vunpack.c.0.s8 %v618
    %v620 = vlaneseq
    %v621 = vshrl.u32 %v620, 7
    %v622 = vsub.s32 %v619, %v621
    %v623 = vrot.slane %v615, %v622
    %v625 = vunpack.c.l.s4 1934713408
    %v626 = vunpack.c.0.s8 %v625
    %v627 = vlaneseq
    %v628 = vshrl.u32 %v627, 7
    %v629 = vsub.s32 %v626, %v628
    %v630 = vrot.slane %v616, %v629
    %v631 = vcombine.low %v566, %v582
    %v632 = vcombine.high %v566, %v582
    %v634 = vunpack.c.l.s4 1934713408
    %v635 = vunpack.c.0.s8 %v634
    %v636 = vlaneseq
    %v637 = vshrl.u32 %v636, 7
    %v638 = vsub.s32 %v635, %v637
    %v639 = vrot.slane %v631, %v638
    %v641 = vunpack.c.l.s4 1934713408
    %v642 = vunpack.c.0.s8 %v641
    %v643 = vlaneseq
    %v644 = vshrl.u32 %v643, 7
    %v645 = vsub.s32 %v642, %v644
    %v646 = vrot.slane %v632, %v645
    %v647 = vcombine.low %v591, %v623
    %v648 = vcombine.high %v591, %v623
    %v649 = vcombine.low %v598, %v630
    %v650 = vcombine.high %v598, %v630
    %v651 = vcombine.low %v607, %v639
    %v652 = vcombine.high %v607, %v639
    %v653 = vcombine.low %v614, %v646
    %v654 = vcombine.high %v614, %v646
    %v655 = vcombine.low %v66, %v110
    %v656 = vcombine.high %v66, %v110
    %v658 = vunpack.c.l.s4 1983009808
    %v659 = vunpack.c.0.s8 %v658
    %v660 = vlaneseq
    %v661 = vshrl.u32 %v660, 7
    %v662 = vsub.s32 %v659, %v661
    %v663 = vrot.slane %v655, %v662
    %v665 = vunpack.c.l.s4 1983009808
    %v666 = vunpack.c.0.s8 %v665
    %v667 = vlaneseq
    %v668 = vshrl.u32 %v667, 7
    %v669 = vsub.s32 %v666, %v668
    %v670 = vrot.slane %v656, %v669
    %v671 = vcombine.low %v86, %v134
    %v672 = vcombine.high %v86, %v134
    %v674 = vunpack.c.l.s4 1983009808
    %v675 = vunpack.c.0.s8 %v674
    %v676 = vlaneseq
    %v677 = vshrl.u32 %v676, 7
    %v678 = vsub.s32 %v675, %v677
    %v679 = vrot.slane %v671, %v678
    %v681 = vunpack.c.l.s4 1983009808
    %v682 = vunpack.c.0.s8 %v681
    %v683 = vlaneseq
    %v684 = vshrl.u32 %v683, 7
    %v685 = vsub.s32 %v682, %v684
    %v686 = vrot.slane %v672, %v685
    %v687 = vcombine.low %v158, %v206
    %v688 = vcombine.high %v158, %v206
    %v690 = vunpack.c.l.s4 1983009808
    %v691 = vunpack.c.0.s8 %v690
    %v692 = vlaneseq
    %v693 = vshrl.u32 %v692, 7
    %v694 = vsub.s32 %v691, %v693
    %v695 = vrot.slane %v687, %v694
    %v697 = vunpack.c.l.s4 1983009808
    %v698 = vunpack.c.0.s8 %v697
    %v699 = vlaneseq
    %v700 = vshrl.u32 %v699, 7
    %v701 = vsub.s32 %v698, %v700
    %v702 = vrot.slane %v688, %v701
    %v703 = vcombine.low %v182, %v230
    %v704 = vcombine.high %v182, %v230
    %v706 = vunpack.c.l.s4 1983009808
    %v707 = vunpack.c.0.s8 %v706
    %v708 = vlaneseq
    %v709 = vshrl.u32 %v708, 7
    %v710 = vsub.s32 %v707, %v709
    %v711 = vrot.slane %v703, %v710
    %v713 = vunpack.c.l.s4 1983009808
    %v714 = vunpack.c.0.s8 %v713
    %v715 = vlaneseq
    %v716 = vshrl.u32 %v715, 7
    %v717 = vsub.s32 %v714, %v716
    %v718 = vrot.slane %v704, %v717
    %v719 = vcombine.low %v663, %v679
    %v720 = vcombine.high %v663, %v679
    %v722 = vunpack.c.l.s4 1934713408
    %v723 = vunpack.c.0.s8 %v722
    %v724 = vlaneseq
    %v725 = vshrl.u32 %v724, 7
    %v726 = vsub.s32 %v723, %v725
    %v727 = vrot.slane %v719, %v726
    %v729 = vunpack.c.l.s4 1934713408
    %v730 = vunpack.c.0.s8 %v729
    %v731 = vlaneseq
    %v732 = vshrl.u32 %v731, 7
    %v733 = vsub.s32 %v730, %v732
    %v734 = vrot.slane %v720, %v733
    %v735 = vcombine.low %v670, %v686
    %v736 = vcombine.high %v670, %v686
    %v738 = vunpack.c.l.s4 1934713408
    %v739 = vunpack.c.0.s8 %v738
    %v740 = vlaneseq
    %v741 = vshrl.u32 %v740, 7
    %v742 = vsub.s32 %v739, %v741
    %v743 = vrot.slane %v735, %v742
    %v745 = vunpack.c.l.s4 1934713408
    %v746 = vunpack.c.0.s8 %v745
    %v747 = vlaneseq
    %v748 = vshrl.u32 %v747, 7
    %v749 = vsub.s32 %v746, %v748
    %v750 = vrot.slane %v736, %v749
    %v751 = vcombine.low %v695, %v711
    %v752 = vcombine.high %v695, %v711
    %v754 = vunpack.c.l.s4 1934713408
    %v755 = vunpack.c.0.s8 %v754
    %v756 = vlaneseq
    %v757 = vshrl.u32 %v756, 7
    %v758 = vsub.s32 %v755, %v757
    %v759 = vrot.slane %v751, %v758
    %v761 = vunpack.c.l.s4 1934713408
    %v762 = vunpack.c.0.s8 %v761
    %v763 = vlaneseq
    %v764 = vshrl.u32 %v763, 7
    %v765 = vsub.s32 %v762, %v764
    %v766 = vrot.slane %v752, %v765
    %v767 = vcombine.low %v702, %v718
    %v768 = vcombine.high %v702, %v718
    %v770 = vunpack.c.l.s4 1934713408
    %v771 = vunpack.c.0.s8 %v770
    %v772 = vlaneseq
    %v773 = vshrl.u32 %v772, 7
    %v774 = vsub.s32 %v771, %v773
    %v775 = vrot.slane %v767, %v774
    %v777 = vunpack.c.l.s4 1934713408
    %v778 = vunpack.c.0.s8 %v777
    %v779 = vlaneseq
    %v780 = vshrl.u32 %v779, 7
    %v781 = vsub.s32 %v778, %v780
    %v782 = vrot.slane %v768, %v781
    %v783 = vcombine.low %v727, %v759
    %v784 = vcombine.high %v727, %v759
    %v785 = vcombine.low %v734, %v766
    %v786 = vcombine.high %v734, %v766
    %v787 = vcombine.low %v743, %v775
    %v788 = vcombine.high %v743, %v775
    %v789 = vcombine.low %v750, %v782
    %v790 = vcombine.high %v750, %v782
    %v791 = vcombine.low %v67, %v112
    %v792 = vcombine.high %v67, %v112
    %v794 = vunpack.c.l.s4 1983009808
    %v795 = vunpack.c.0.s8 %v794
    %v796 = vlaneseq
    %v797 = vshrl.u32 %v796, 7
    %v798 = vsub.s32 %v795, %v797
    %v799 = vrot.slane %v791, %v798
    %v801 = vunpack.c.l.s4 1983009808
    %v802 = vunpack.c.0.s8 %v801
    %v803 = vlaneseq
    %v804 = vshrl.u32 %v803, 7
    %v805 = vsub.s32 %v802, %v804
    %v806 = vrot.slane %v792, %v805
    %v807 = vcombine.low %v88, %v136
    %v808 = vcombine.high %v88, %v136
    %v810 = vunpack.c.l.s4 1983009808
    %v811 = vunpack.c.0.s8 %v810
    %v812 = vlaneseq
    %v813 = vshrl.u32 %v812, 7
    %v814 = vsub.s32 %v811, %v813
    %v815 = vrot.slane %v807, %v814
    %v817 = vunpack.c.l.s4 1983009808
    %v818 = vunpack.c.0.s8 %v817
    %v819 = vlaneseq
    %v820 = vshrl.u32 %v819, 7
    %v821 = vsub.s32 %v818, %v820
    %v822 = vrot.slane %v808, %v821
    %v823 = vcombine.low %v160, %v208
    %v824 = vcombine.high %v160, %v208
    %v826 = vunpack.c.l.s4 1983009808
    %v827 = vunpack.c.0.s8 %v826
    %v828 = vlaneseq
    %v829 = vshrl.u32 %v828, 7
    %v830 = vsub.s32 %v827, %v829
    %v831 = vrot.slane %v823, %v830
    %v833 = vunpack.c.l.s4 1983009808
    %v834 = vunpack.c.0.s8 %v833
    %v835 = vlaneseq
    %v836 = vshrl.u32 %v835, 7
    %v837 = vsub.s32 %v834, %v836
    %v838 = vrot.slane %v824, %v837
    %v839 = vcombine.low %v184, %v232
    %v840 = vcombine.high %v184, %v232
    %v842 = vunpack.c.l.s4 1983009808
    %v843 = vunpack.c.0.s8 %v842
    %v844 = vlaneseq
    %v845 = vshrl.u32 %v844, 7
    %v846 = vsub.s32 %v843, %v845
    %v847 = vrot.slane %v839, %v846
    %v849 = vunpack.c.l.s4 1983009808
    %v850 = vunpack.c.0.s8 %v849
    %v851 = vlaneseq
    %v852 = vshrl.u32 %v851, 7
    %v853 = vsub.s32 %v850, %v852
    %v854 = vrot.slane %v840, %v853
    %v855 = vcombine.low %v799, %v815
    %v856 = vcombine.high %v799, %v815
    %v858 = vunpack.c.l.s4 1934713408
    %v859 = vunpack.c.0.s8 %v858
    %v860 = vlaneseq
    %v861 = vshrl.u32 %v860, 7
    %v862 = vsub.s32 %v859, %v861
    %v863 = vrot.slane %v855, %v862
    %v865 = vunpack.c.l.s4 1934713408
    %v866 = vunpack.c.0.s8 %v865
    %v867 = vlaneseq
    %v868 = vshrl.u32 %v867, 7
    %v869 = vsub.s32 %v866, %v868
    %v870 = vrot.slane %v856, %v869
    %v871 = vcombine.low %v806, %v822
    %v872 = vcombine.high %v806, %v822
    %v874 = vunpack.c.l.s4 1934713408
    %v875 = vunpack.c.0.s8 %v874
    %v876 = vlaneseq
    %v877 = vshrl.u32 %v876, 7
    %v878 = vsub.s32 %v875, %v877
    %v879 = vrot.slane %v871, %v878
    %v881 = vunpack.c.l.s4 1934713408
    %v882 = vunpack.c.0.s8 %v881
    %v883 = vlaneseq
    %v884 = vshrl.u32 %v883, 7
    %v885 = vsub.s32 %v882, %v884
    %v886 = vrot.slane %v872, %v885
    %v887 = vcombine.low %v831, %v847
    %v888 = vcombine.high %v831, %v847
    %v890 = vunpack.c.l.s4 1934713408
    %v891 = vunpack.c.0.s8 %v890
    %v892 = vlaneseq
    %v893 = vshrl.u32 %v892, 7
    %v894 = vsub.s32 %v891, %v893
    %v895 = vrot.slane %v887, %v894
    %v897 = vunpack.c.l.s4 1934713408
    %v898 = vunpack.c.0.s8 %v897
    %v899 = vlaneseq
    %v900 = vshrl.u32 %v899, 7
    %v901 = vsub.s32 %v898, %v900
    %v902 = vrot.slane %v888, %v901
    %v903 = vcombine.low %v838, %v854
    %v904 = vcombine.high %v838, %v854
    %v906 = vunpack.c.l.s4 1934713408
    %v907 = vunpack.c.0.s8 %v906
    %v908 = vlaneseq
    %v909 = vshrl.u32 %v908, 7
    %v910 = vsub.s32 %v907, %v909
    %v911 = vrot.slane %v903, %v910
    %v913 = vunpack.c.l.s4 1934713408
    %v914 = vunpack.c.0.s8 %v913
    %v915 = vlaneseq
    %v916 = vshrl.u32 %v915, 7
    %v917 = vsub.s32 %v914, %v916
    %v918 = vrot.slane %v904, %v917
    %v919 = vcombine.low %v863, %v895
    %v920 = vcombine.high %v863, %v895
    %v921 = vcombine.low %v870, %v902
    %v922 = vcombine.high %v870, %v902
    %v923 = vcombine.low %v879, %v911
    %v924 = vcombine.high %v879, %v911
    %v925 = vcombine.low %v886, %v918
    %v926 = vcombine.high %v886, %v918
    %v927 = vcombine.low %v68, %v114
    %v928 = vcombine.high %v68, %v114
    %v930 = vunpack.c.l.s4 1983009808
    %v931 = vunpack.c.0.s8 %v930
    %v932 = vlaneseq
    %v933 = vshrl.u32 %v932, 7
    %v934 = vsub.s32 %v931, %v933
    %v935 = vrot.slane %v927, %v934
    %v937 = vunpack.c.l.s4 1983009808
    %v938 = vunpack.c.0.s8 %v937
    %v939 = vlaneseq
    %v940 = vshrl.u32 %v939, 7
    %v941 = vsub.s32 %v938, %v940
    %v942 = vrot.slane %v928, %v941
    %v943 = vcombine.low %v90, %v138
    %v944 = vcombine.high %v90, %v138
    %v946 = vunpack.c.l.s4 1983009808
    %v947 = vunpack.c.0.s8 %v946
    %v948 = vlaneseq
    %v949 = vshrl.u32 %v948, 7
    %v950 = vsub.s32 %v947, %v949
    %v951 = vrot.slane %v943, %v950
    %v953 = vunpack.c.l.s4 1983009808
    %v954 = vunpack.c.0.s8 %v953
    %v955 = vlaneseq
    %v956 = vshrl.u32 %v955, 7
    %v957 = vsub.s32 %v954, %v956
    %v958 = vrot.slane %v944, %v957
    %v959 = vcombine.low %v162, %v210
    %v960 = vcombine.high %v162, %v210
    %v962 = vunpack.c.l.s4 1983009808
    %v963 = vunpack.c.0.s8 %v962
    %v964 = vlaneseq
    %v965 = vshrl.u32 %v964, 7
    %v966 = vsub.s32 %v963, %v965
    %v967 = vrot.slane %v959, %v966
    %v969 = vunpack.c.l.s4 1983009808
    %v970 = vunpack.c.0.s8 %v969
    %v971 = vlaneseq
    %v972 = vshrl.u32 %v971, 7
    %v973 = vsub.s32 %v970, %v972
    %v974 = vrot.slane %v960, %v973
    %v975 = vcombine.low %v186, %v234
    %v976 = vcombine.high %v186, %v234
    %v978 = vunpack.c.l.s4 1983009808
    %v979 = vunpack.c.0.s8 %v978
    %v980 = vlaneseq
    %v981 = vshrl.u32 %v980, 7
    %v982 = vsub.s32 %v979, %v981
    %v983 = vrot.slane %v975, %v982
    %v985 = vunpack.c.l.s4 1983009808
    %v986 = vunpack.c.0.s8 %v985
    %v987 = vlaneseq
    %v988 = vshrl.u32 %v987, 7
    %v989 = vsub.s32 %v986, %v988
    %v990 = vrot.slane %v976, %v989
    %v991 = vcombine.low %v935, %v951
    %v992 = vcombine.high %v935, %v951
    %v994 = vunpack.c.l.s4 1934713408
    %v995 = vunpack.c.0.s8 %v994
    %v996 = vlaneseq
    %v997 = vshrl.u32 %v996, 7
    %v998 = vsub.s32 %v995, %v997
    %v999 = vrot.slane %v991, %v998
    %v1001 = vunpack.c.l.s4 1934713408
    %v1002 = vunpack.c.0.s8 %v1001
    %v1003 = vlaneseq
    %v1004 = vshrl.u32 %v1003, 7
    %v1005 = vsub.s32 %v1002, %v1004
    %v1006 = vrot.slane %v992, %v1005
    %v1007 = vcombine.low %v942, %v958
    %v1008 = vcombine.high %v942, %v958
    %v1010 = vunpack.c.l.s4 1934713408
    %v1011 = vunpack.c.0.s8 %v1010
    %v1012 = vlaneseq
    %v1013 = vshrl.u32 %v1012, 7
    %v1014 = vsub.s32 %v1011, %v1013
    %v1015 = vrot.slane %v1007, %v1014
    %v1017 = vunpack.c.l.s4 1934713408
    %v1018 = vunpack.c.0.s8 %v1017
    %v1019 = vlaneseq
    %v1020 = vshrl.u32 %v1019, 7
    %v1021 = vsub.s32 %v1018, %v1020
    %v1022 = vrot.slane %v1008, %v1021
    %v1023 = vcombine.low %v967, %v983
    %v1024 = vcombine.high %v967, %v983
    %v1026 = vunpack.c.l.s4 1934713408
    %v1027 = vunpack.c.0.s8 %v1026
    %v1028 = vlaneseq
    %v1029 = vshrl.u32 %v1028, 7
    %v1030 = vsub.s32 %v1027, %v1029
    %v1031 = vrot.slane %v1023, %v1030
    %v1033 = vunpack.c.l.s4 1934713408
    %v1034 = vunpack.c.0.s8 %v1033
    %v1035 = vlaneseq
    %v1036 = vshrl.u32 %v1035, 7
    %v1037 = vsub.s32 %v1034, %v1036
    %v1038 = vrot.slane %v1024, %v1037
    %v1039 = vcombine.low %v974, %v990
    %v1040 = vcombine.high %v974, %v990
    %v1042 = vunpack.c.l.s4 1934713408
    %v1043 = vunpack.c.0.s8 %v1042
    %v1044 = vlaneseq
    %v1045 = vshrl.u32 %v1044, 7
    %v1046 = vsub.s32 %v1043, %v1045
    %v1047 = vrot.slane %v1039, %v1046
    %v1049 = vunpack.c.l.s4 1934713408
    %v1050 = vunpack.c.0.s8 %v1049
    %v1051 = vlaneseq
    %v1052 = vshrl.u32 %v1051, 7
    %v1053 = vsub.s32 %v1050, %v1052
    %v1054 = vrot.slane %v1040, %v1053
    %v1055 = vcombine.low %v999, %v1031
    %v1056 = vcombine.high %v999, %v1031
    %v1057 = vcombine.low %v1006, %v1038
    %v1058 = vcombine.high %v1006, %v1038
    %v1059 = vcombine.low %v1015, %v1047
    %v1060 = vcombine.high %v1015, %v1047
    %v1061 = vcombine.low %v1022, %v1054
    %v1062 = vcombine.high %v1022, %v1054
    %v1063 = vcombine.low %v69, %v116
    %v1064 = vcombine.high %v69, %v116
    %v1066 = vunpack.c.l.s4 1983009808
    %v1067 = vunpack.c.0.s8 %v1066
    %v1068 = vlaneseq
    %v1069 = vshrl.u32 %v1068, 7
    %v1070 = vsub.s32 %v1067, %v1069
    %v1071 = vrot.slane %v1063, %v1070
    %v1073 = vunpack.c.l.s4 1983009808
    %v1074 = vunpack.c.0.s8 %v1073
    %v1075 = vlaneseq
    %v1076 = vshrl.u32 %v1075, 7
    %v1077 = vsub.s32 %v1074, %v1076
    %v1078 = vrot.slane %v1064, %v1077
    %v1079 = vcombine.low %v92, %v140
    %v1080 = vcombine.high %v92, %v140
    %v1082 = vunpack.c.l.s4 1983009808
    %v1083 = vunpack.c.0.s8 %v1082
    %v1084 = vlaneseq
    %v1085 = vshrl.u32 %v1084, 7
    %v1086 = vsub.s32 %v1083, %v1085
    %v1087 = vrot.slane %v1079, %v1086
    %v1089 = vunpack.c.l.s4 1983009808
    %v1090 = vunpack.c.0.s8 %v1089
    %v1091 = vlaneseq
    %v1092 = vshrl.u32 %v1091, 7
    %v1093 = vsub.s32 %v1090, %v1092
    %v1094 = vrot.slane %v1080, %v1093
    %v1095 = vcombine.low %v164, %v212
    %v1096 = vcombine.high %v164, %v212
    %v1098 = vunpack.c.l.s4 1983009808
    %v1099 = vunpack.c.0.s8 %v1098
    %v1100 = vlaneseq
    %v1101 = vshrl.u32 %v1100, 7
    %v1102 = vsub.s32 %v1099, %v1101
    %v1103 = vrot.slane %v1095, %v1102
    %v1105 = vunpack.c.l.s4 1983009808
    %v1106 = vunpack.c.0.s8 %v1105
    %v1107 = vlaneseq
    %v1108 = vshrl.u32 %v1107, 7
    %v1109 = vsub.s32 %v1106, %v1108
    %v1110 = vrot.slane %v1096, %v1109
    %v1111 = vcombine.low %v188, %v236
    %v1112 = vcombine.high %v188, %v236
    %v1114 = vunpack.c.l.s4 1983009808
    %v1115 = vunpack.c.0.s8 %v1114
    %v1116 = vlaneseq
    %v1117 = vshrl.u32 %v1116, 7
    %v1118 = vsub.s32 %v1115, %v1117
    %v1119 = vrot.slane %v1111, %v1118
    %v1121 = vunpack.c.l.s4 1983009808
    %v1122 = vunpack.c.0.s8 %v1121
    %v1123 = vlaneseq
    %v1124 = vshrl.u32 %v1123, 7
    %v1125 = vsub.s32 %v1122, %v1124
    %v1126 = vrot.slane %v1112, %v1125
    %v1127 = vcombine.low %v1071, %v1087
    %v1128 = vcombine.high %v1071, %v1087
    %v1130 = vunpack.c.l.s4 1934713408
    %v1131 = vunpack.c.0.s8 %v1130
    %v1132 = vlaneseq
    %v1133 = vshrl.u32 %v1132, 7
    %v1134 = vsub.s32 %v1131, %v1133
    %v1135 = vrot.slane %v1127, %v1134
    %v1137 = vunpack.c.l.s4 1934713408
    %v1138 = vunpack.c.0.s8 %v1137
    %v1139 = vlaneseq
    %v1140 = vshrl.u32 %v1139, 7
    %v1141 = vsub.s32 %v1138, %v1140
    %v1142 = vrot.slane %v1128, %v1141
    %v1143 = vcombine.low %v1078, %v1094
    %v1144 = vcombine.high %v1078, %v1094
    %v1146 = vunpack.c.l.s4 1934713408
    %v1147 = vunpack.c.0.s8 %v1146
    %v1148 = vlaneseq
    %v1149 = vshrl.u32 %v1148, 7
    %v1150 = vsub.s32 %v1147, %v1149
    %v1151 = vrot.slane %v1143, %v1150
    %v1153 = vunpack.c.l.s4 1934713408
    %v1154 = vunpack.c.0.s8 %v1153
    %v1155 = vlaneseq
    %v1156 = vshrl.u32 %v1155, 7
    %v1157 = vsub.s32 %v1154, %v1156
    %v1158 = vrot.slane %v1144, %v1157
    %v1159 = vcombine.low %v1103, %v1119
    %v1160 = vcombine.high %v1103, %v1119
    %v1162 = vunpack.c.l.s4 1934713408
    %v1163 = vunpack.c.0.s8 %v1162
    %v1164 = vlaneseq
    %v1165 = vshrl.u32 %v1164, 7
    %v1166 = vsub.s32 %v1163, %v1165
    %v1167 = vrot.slane %v1159, %v1166
    %v1169 = vunpack.c.l.s4 1934713408
    %v1170 = vunpack.c.0.s8 %v1169
    %v1171 = vlaneseq
    %v1172 = vshrl.u32 %v1171, 7
    %v1173 = vsub.s32 %v1170, %v1172
    %v1174 = vrot.slane %v1160, %v1173
    %v1175 = vcombine.low %v1110, %v1126
    %v1176 = vcombine.high %v1110, %v1126
    %v1178 = vunpack.c.l.s4 1934713408
    %v1179 = vunpack.c.0.s8 %v1178
    %v1180 = vlaneseq
    %v1181 = vshrl.u32 %v1180, 7
    %v1182 = vsub.s32 %v1179, %v1181
    %v1183 = vrot.slane %v1175, %v1182
    %v1185 = vunpack.c.l.s4 1934713408
    %v1186 = vunpack.c.0.s8 %v1185
    %v1187 = vlaneseq
    %v1188 = vshrl.u32 %v1187, 7
    %v1189 = vsub.s32 %v1186, %v1188
    %v1190 = vrot.slane %v1176, %v1189
    %v1191 = vcombine.low %v1135, %v1167
    %v1192 = vcombine.high %v1135, %v1167
    %v1193 = vcombine.low %v1142, %v1174
    %v1194 = vcombine.high %v1142, %v1174
    %v1195 = vcombine.low %v1151, %v1183
    %v1196 = vcombine.high %v1151, %v1183
    %v1197 = vcombine.low %v1158, %v1190
    %v1198 = vcombine.high %v1158, %v1190
    %v1199 = vcombine.low %v70, %v118
    %v1200 = vcombine.high %v70, %v118
    %v1202 = vunpack.c.l.s4 1983009808
    %v1203 = vunpack.c.0.s8 %v1202
    %v1204 = vlaneseq
    %v1205 = vshrl.u32 %v1204, 7
    %v1206 = vsub.s32 %v1203, %v1205
    %v1207 = vrot.slane %v1199, %v1206
    %v1209 = vunpack.c.l.s4 1983009808
    %v1210 = vunpack.c.0.s8 %v1209
    %v1211 = vlaneseq
    %v1212 = vshrl.u32 %v1211, 7
    %v1213 = vsub.s32 %v1210, %v1212
    %v1214 = vrot.slane %v1200, %v1213
    %v1215 = vcombine.low %v94, %v142
    %v1216 = vcombine.high %v94, %v142
    %v1218 = vunpack.c.l.s4 1983009808
    %v1219 = vunpack.c.0.s8 %v1218
    %v1220 = vlaneseq
    %v1221 = vshrl.u32 %v1220, 7
    %v1222 = vsub.s32 %v1219, %v1221
    %v1223 = vrot.slane %v1215, %v1222
    %v1225 = vunpack.c.l.s4 1983009808
    %v1226 = vunpack.c.0.s8 %v1225
    %v1227 = vlaneseq
    %v1228 = vshrl.u32 %v1227, 7
    %v1229 = vsub.s32 %v1226, %v1228
    %v1230 = vrot.slane %v1216, %v1229
    %v1231 = vcombine.low %v166, %v214
    %v1232 = vcombine.high %v166, %v214
    %v1234 = vunpack.c.l.s4 1983009808
    %v1235 = vunpack.c.0.s8 %v1234
    %v1236 = vlaneseq
    %v1237 = vshrl.u32 %v1236, 7
    %v1238 = vsub.s32 %v1235, %v1237
    %v1239 = vrot.slane %v1231, %v1238
    %v1241 = vunpack.c.l.s4 1983009808
    %v1242 = vunpack.c.0.s8 %v1241
    %v1243 = vlaneseq
    %v1244 = vshrl.u32 %v1243, 7
    %v1245 = vsub.s32 %v1242, %v1244
    %v1246 = vrot.slane %v1232, %v1245
    %v1247 = vcombine.low %v190, %v238
    %v1248 = vcombine.high %v190, %v238
    %v1250 = vunpack.c.l.s4 1983009808
    %v1251 = vunpack.c.0.s8 %v1250
    %v1252 = vlaneseq
    %v1253 = vshrl.u32 %v1252, 7
    %v1254 = vsub.s32 %v1251, %v1253
    %v1255 = vrot.slane %v1247, %v1254
    %v1257 = vunpack.c.l.s4 1983009808
    %v1258 = vunpack.c.0.s8 %v1257
    %v1259 = vlaneseq
    %v1260 = vshrl.u32 %v1259, 7
    %v1261 = vsub.s32 %v1258, %v1260
    %v1262 = vrot.slane %v1248, %v1261
    %v1263 = vcombine.low %v1207, %v1223
    %v1264 = vcombine.high %v1207, %v1223
    %v1266 = vunpack.c.l.s4 1934713408
    %v1267 = vunpack.c.0.s8 %v1266
    %v1268 = vlaneseq
    %v1269 = vshrl.u32 %v1268, 7
    %v1270 = vsub.s32 %v1267, %v1269
    %v1271 = vrot.slane %v1263, %v1270
    %v1273 = vunpack.c.l.s4 1934713408
    %v1274 = vunpack.c.0.s8 %v1273
    %v1275 = vlaneseq
    %v1276 = vshrl.u32 %v1275, 7
    %v1277 = vsub.s32 %v1274, %v1276
    %v1278 = vrot.slane %v1264, %v1277
    %v1279 = vcombine.low %v1214, %v1230
    %v1280 = vcombine.high %v1214, %v1230
    %v1282 = vunpack.c.l.s4 1934713408
    %v1283 = vunpack.c.0.s8 %v1282
    %v1284 = vlaneseq
    %v1285 = vshrl.u32 %v1284, 7
    %v1286 = vsub.s32 %v1283, %v1285
    %v1287 = vrot.slane %v1279, %v1286
    %v1289 = vunpack.c.l.s4 1934713408
    %v1290 = vunpack.c.0.s8 %v1289
    %v1291 = vlaneseq
    %v1292 = vshrl.u32 %v1291, 7
    %v1293 = vsub.s32 %v1290, %v1292
    %v1294 = vrot.slane %v1280, %v1293
    %v1295 = vcombine.low %v1239, %v1255
    %v1296 = vcombine.high %v1239, %v1255
    %v1298 = vunpack.c.l.s4 1934713408
    %v1299 = vunpack.c.0.s8 %v1298
    %v1300 = vlaneseq
    %v1301 = vshrl.u32 %v1300, 7
    %v1302 = vsub.s32 %v1299, %v1301
    %v1303 = vrot.slane %v1295, %v1302
    %v1305 = vunpack.c.l.s4 1934713408
    %v1306 = vunpack.c.0.s8 %v1305
    %v1307 = vlaneseq
    %v1308 = vshrl.u32 %v1307, 7
    %v1309 = vsub.s32 %v1306, %v1308
    %v1310 = vrot.slane %v1296, %v1309
    %v1311 = vcombine.low %v1246, %v1262
    %v1312 = vcombine.high %v1246, %v1262
    %v1314 = vunpack.c.l.s4 1934713408
    %v1315 = vunpack.c.0.s8 %v1314
    %v1316 = vlaneseq
    %v1317 = vshrl.u32 %v1316, 7
    %v1318 = vsub.s32 %v1315, %v1317
    %v1319 = vrot.slane %v1311, %v1318
    %v1321 = vunpack.c.l.s4 1934713408
    %v1322 = vunpack.c.0.s8 %v1321
    %v1323 = vlaneseq
    %v1324 = vshrl.u32 %v1323, 7
    %v1325 = vsub.s32 %v1322, %v1324
    %v1326 = vrot.slane %v1312, %v1325
    %v1327 = vcombine.low %v1271, %v1303
    %v1328 = vcombine.high %v1271, %v1303
    %v1329 = vcombine.low %v1278, %v1310
    %v1330 = vcombine.high %v1278, %v1310
    %v1331 = vcombine.low %v1287, %v1319
    %v1332 = vcombine.high %v1287, %v1319
    %v1333 = vcombine.low %v1294, %v1326
    %v1334 = vcombine.high %v1294, %v1326
    %vm1335 = vcmask 15360
    %v1336 = vsel %vm1335, %v375, -inf
    %1337 = vmax.xlane.f32.xlu0 %v1336
    %v1338 = vpop.xlane.xlu0 %1337
    %v1339 = vsel %vm1335, %v376, -inf
    %1340 = vmax.xlane.f32.xlu0 %v1339
    %v1341 = vpop.xlane.xlu0 %1340
    %v1342 = vsel %vm1335, %v377, -inf
    %1343 = vmax.xlane.f32.xlu0 %v1342
    %v1344 = vpop.xlane.xlu0 %1343
    %v1345 = vsel %vm1335, %v378, -inf
    %1346 = vmax.xlane.f32.xlu0 %v1345
    %v1347 = vpop.xlane.xlu0 %1346
    %v1348 = vsel %vm1335, %v379, -inf
    %1349 = vmax.xlane.f32.xlu0 %v1348
    %v1350 = vpop.xlane.xlu0 %1349
    %v1351 = vsel %vm1335, %v380, -inf
    %1352 = vmax.xlane.f32.xlu0 %v1351
    %v1353 = vpop.xlane.xlu0 %1352
    %v1354 = vsel %vm1335, %v381, -inf
    %1355 = vmax.xlane.f32.xlu0 %v1354
    %v1356 = vpop.xlane.xlu0 %1355
    %v1357 = vsel %vm1335, %v382, -inf
    %1358 = vmax.xlane.f32.xlu0 %v1357
    %v1359 = vpop.xlane.xlu0 %1358
    %v1360 = vsel %vm1335, %v511, -inf
    %1361 = vmax.xlane.f32.xlu0 %v1360
    %v1362 = vpop.xlane.xlu0 %1361
    %v1363 = vsel %vm1335, %v512, -inf
    %1364 = vmax.xlane.f32.xlu0 %v1363
    %v1365 = vpop.xlane.xlu0 %1364
    %v1366 = vsel %vm1335, %v513, -inf
    %1367 = vmax.xlane.f32.xlu0 %v1366
    %v1368 = vpop.xlane.xlu0 %1367
    %v1369 = vsel %vm1335, %v514, -inf
    %1370 = vmax.xlane.f32.xlu0 %v1369
    %v1371 = vpop.xlane.xlu0 %1370
    %v1372 = vsel %vm1335, %v515, -inf
    %1373 = vmax.xlane.f32.xlu0 %v1372
    %v1374 = vpop.xlane.xlu0 %1373
    %v1375 = vsel %vm1335, %v516, -inf
    %1376 = vmax.xlane.f32.xlu0 %v1375
    %v1377 = vpop.xlane.xlu0 %1376
    %v1378 = vsel %vm1335, %v517, -inf
    %1379 = vmax.xlane.f32.xlu0 %v1378
    %v1380 = vpop.xlane.xlu0 %1379
    %v1381 = vsel %vm1335, %v518, -inf
    %1382 = vmax.xlane.f32.xlu0 %v1381
    %v1383 = vpop.xlane.xlu0 %1382
    %v1384 = vsel %vm1335, %v647, -inf
    %1385 = vmax.xlane.f32.xlu0 %v1384
    %v1386 = vpop.xlane.xlu0 %1385
    %v1387 = vsel %vm1335, %v648, -inf
    %1388 = vmax.xlane.f32.xlu0 %v1387
    %v1389 = vpop.xlane.xlu0 %1388
    %v1390 = vsel %vm1335, %v649, -inf
    %1391 = vmax.xlane.f32.xlu0 %v1390
    %v1392 = vpop.xlane.xlu0 %1391
    %v1393 = vsel %vm1335, %v650, -inf
    %1394 = vmax.xlane.f32.xlu0 %v1393
    %v1395 = vpop.xlane.xlu0 %1394
    %v1396 = vsel %vm1335, %v651, -inf
    %1397 = vmax.xlane.f32.xlu0 %v1396
    %v1398 = vpop.xlane.xlu0 %1397
    %v1399 = vsel %vm1335, %v652, -inf
    %1400 = vmax.xlane.f32.xlu0 %v1399
    %v1401 = vpop.xlane.xlu0 %1400
    %v1402 = vsel %vm1335, %v653, -inf
    %1403 = vmax.xlane.f32.xlu0 %v1402
    %v1404 = vpop.xlane.xlu0 %1403
    %v1405 = vsel %vm1335, %v654, -inf
    %1406 = vmax.xlane.f32.xlu0 %v1405
    %v1407 = vpop.xlane.xlu0 %1406
    %v1408 = vsel %vm1335, %v783, -inf
    %1409 = vmax.xlane.f32.xlu0 %v1408
    %v1410 = vpop.xlane.xlu0 %1409
    %v1411 = vsel %vm1335, %v784, -inf
    %1412 = vmax.xlane.f32.xlu0 %v1411
    %v1413 = vpop.xlane.xlu0 %1412
    %v1414 = vsel %vm1335, %v785, -inf
    %1415 = vmax.xlane.f32.xlu0 %v1414
    %v1416 = vpop.xlane.xlu0 %1415
    %v1417 = vsel %vm1335, %v786, -inf
    %1418 = vmax.xlane.f32.xlu0 %v1417
    %v1419 = vpop.xlane.xlu0 %1418
    %v1420 = vsel %vm1335, %v787, -inf
    %1421 = vmax.xlane.f32.xlu0 %v1420
    %v1422 = vpop.xlane.xlu0 %1421
    %v1423 = vsel %vm1335, %v788, -inf
    %1424 = vmax.xlane.f32.xlu0 %v1423
    %v1425 = vpop.xlane.xlu0 %1424
    %v1426 = vsel %vm1335, %v789, -inf
    %1427 = vmax.xlane.f32.xlu0 %v1426
    %v1428 = vpop.xlane.xlu0 %1427
    %v1429 = vsel %vm1335, %v790, -inf
    %1430 = vmax.xlane.f32.xlu0 %v1429
    %v1431 = vpop.xlane.xlu0 %1430
    %v1432 = vsel %vm1335, %v919, -inf
    %1433 = vmax.xlane.f32.xlu0 %v1432
    %v1434 = vpop.xlane.xlu0 %1433
    %v1435 = vsel %vm1335, %v920, -inf
    %1436 = vmax.xlane.f32.xlu0 %v1435
    %v1437 = vpop.xlane.xlu0 %1436
    %v1438 = vsel %vm1335, %v921, -inf
    %1439 = vmax.xlane.f32.xlu0 %v1438
    %v1440 = vpop.xlane.xlu0 %1439
    %v1441 = vsel %vm1335, %v922, -inf
    %1442 = vmax.xlane.f32.xlu0 %v1441
    %v1443 = vpop.xlane.xlu0 %1442
    %v1444 = vsel %vm1335, %v923, -inf
    %1445 = vmax.xlane.f32.xlu0 %v1444
    %v1446 = vpop.xlane.xlu0 %1445
    %v1447 = vsel %vm1335, %v924, -inf
    %1448 = vmax.xlane.f32.xlu0 %v1447
    %v1449 = vpop.xlane.xlu0 %1448
    %v1450 = vsel %vm1335, %v925, -inf
    %1451 = vmax.xlane.f32.xlu0 %v1450
    %v1452 = vpop.xlane.xlu0 %1451
    %v1453 = vsel %vm1335, %v926, -inf
    %1454 = vmax.xlane.f32.xlu0 %v1453
    %v1455 = vpop.xlane.xlu0 %1454
    %v1456 = vsel %vm1335, %v1055, -inf
    %1457 = vmax.xlane.f32.xlu0 %v1456
    %v1458 = vpop.xlane.xlu0 %1457
    %v1459 = vsel %vm1335, %v1056, -inf
    %1460 = vmax.xlane.f32.xlu0 %v1459
    %v1461 = vpop.xlane.xlu0 %1460
    %v1462 = vsel %vm1335, %v1057, -inf
    %1463 = vmax.xlane.f32.xlu0 %v1462
    %v1464 = vpop.xlane.xlu0 %1463
    %v1465 = vsel %vm1335, %v1058, -inf
    %1466 = vmax.xlane.f32.xlu0 %v1465
    %v1467 = vpop.xlane.xlu0 %1466
    %v1468 = vsel %vm1335, %v1059, -inf
    %1469 = vmax.xlane.f32.xlu0 %v1468
    %v1470 = vpop.xlane.xlu0 %1469
    %v1471 = vsel %vm1335, %v1060, -inf
    %1472 = vmax.xlane.f32.xlu0 %v1471
    %v1473 = vpop.xlane.xlu0 %1472
    %v1474 = vsel %vm1335, %v1061, -inf
    %1475 = vmax.xlane.f32.xlu0 %v1474
    %v1476 = vpop.xlane.xlu0 %1475
    %v1477 = vsel %vm1335, %v1062, -inf
    %1478 = vmax.xlane.f32.xlu0 %v1477
    %v1479 = vpop.xlane.xlu0 %1478
    %v1480 = vsel %vm1335, %v1191, -inf
    %1481 = vmax.xlane.f32.xlu0 %v1480
    %v1482 = vpop.xlane.xlu0 %1481
    %v1483 = vsel %vm1335, %v1192, -inf
    %1484 = vmax.xlane.f32.xlu0 %v1483
    %v1485 = vpop.xlane.xlu0 %1484
    %v1486 = vsel %vm1335, %v1193, -inf
    %1487 = vmax.xlane.f32.xlu0 %v1486
    %v1488 = vpop.xlane.xlu0 %1487
    %v1489 = vsel %vm1335, %v1194, -inf
    %1490 = vmax.xlane.f32.xlu0 %v1489
    %v1491 = vpop.xlane.xlu0 %1490
    %v1492 = vsel %vm1335, %v1195, -inf
    %1493 = vmax.xlane.f32.xlu0 %v1492
    %v1494 = vpop.xlane.xlu0 %1493
    %v1495 = vsel %vm1335, %v1196, -inf
    %1496 = vmax.xlane.f32.xlu0 %v1495
    %v1497 = vpop.xlane.xlu0 %1496
    %v1498 = vsel %vm1335, %v1197, -inf
    %1499 = vmax.xlane.f32.xlu0 %v1498
    %v1500 = vpop.xlane.xlu0 %1499
    %v1501 = vsel %vm1335, %v1198, -inf
    %1502 = vmax.xlane.f32.xlu0 %v1501
    %v1503 = vpop.xlane.xlu0 %1502
    %v1504 = vsel %vm1335, %v1327, -inf
    %1505 = vmax.xlane.f32.xlu0 %v1504
    %v1506 = vpop.xlane.xlu0 %1505
    %v1507 = vsel %vm1335, %v1328, -inf
    %1508 = vmax.xlane.f32.xlu0 %v1507
    %v1509 = vpop.xlane.xlu0 %1508
    %v1510 = vsel %vm1335, %v1329, -inf
    %1511 = vmax.xlane.f32.xlu0 %v1510
    %v1512 = vpop.xlane.xlu0 %1511
    %v1513 = vsel %vm1335, %v1330, -inf
    %1514 = vmax.xlane.f32.xlu0 %v1513
    %v1515 = vpop.xlane.xlu0 %1514
    %v1516 = vsel %vm1335, %v1331, -inf
    %1517 = vmax.xlane.f32.xlu0 %v1516
    %v1518 = vpop.xlane.xlu0 %1517
    %v1519 = vsel %vm1335, %v1332, -inf
    %1520 = vmax.xlane.f32.xlu0 %v1519
    %v1521 = vpop.xlane.xlu0 %1520
    %v1522 = vsel %vm1335, %v1333, -inf
    %1523 = vmax.xlane.f32.xlu0 %v1522
    %v1524 = vpop.xlane.xlu0 %1523
    %v1525 = vsel %vm1335, %v1334, -inf
    %1526 = vmax.xlane.f32.xlu0 %v1525
    %v1527 = vpop.xlane.xlu0 %1526
    %v1592 = vlaneseq
    %v1593 = vand.u32 %v1592, 127
    %v1594 = vlaneseq
    %v1595 = vshrl.u32 %v1594, 7
    %v1596 = vsub.s32 %v1593, %v1595
    %v1597 = vrot.slane %v1338, %v1596
    %v1598 = vlaneseq
    %v1599 = vshrl.u32 %v1598, 7
    %v1600 = vsub.s32 %v1593, %v1599
    %v1601 = vrot.slane %v1341, %v1600
    %v1602 = vlaneseq
    %v1603 = vshrl.u32 %v1602, 7
    %v1604 = vsub.s32 %v1593, %v1603
    %v1605 = vrot.slane %v1344, %v1604
    %v1606 = vlaneseq
    %v1607 = vshrl.u32 %v1606, 7
    %v1608 = vsub.s32 %v1593, %v1607
    %v1609 = vrot.slane %v1347, %v1608
    %v1610 = vlaneseq
    %v1611 = vshrl.u32 %v1610, 7
    %v1612 = vsub.s32 %v1593, %v1611
    %v1613 = vrot.slane %v1350, %v1612
    %v1614 = vlaneseq
    %v1615 = vshrl.u32 %v1614, 7
    %v1616 = vsub.s32 %v1593, %v1615
    %v1617 = vrot.slane %v1353, %v1616
    %v1618 = vlaneseq
    %v1619 = vshrl.u32 %v1618, 7
    %v1620 = vsub.s32 %v1593, %v1619
    %v1621 = vrot.slane %v1356, %v1620
    %v1622 = vlaneseq
    %v1623 = vshrl.u32 %v1622, 7
    %v1624 = vsub.s32 %v1593, %v1623
    %v1625 = vrot.slane %v1359, %v1624
    %v1626 = vlaneseq
    %v1627 = vshrl.u32 %v1626, 7
    %v1628 = vsub.s32 %v1593, %v1627
    %v1629 = vrot.slane %v1362, %v1628
    %v1630 = vlaneseq
    %v1631 = vshrl.u32 %v1630, 7
    %v1632 = vsub.s32 %v1593, %v1631
    %v1633 = vrot.slane %v1365, %v1632
    %v1634 = vlaneseq
    %v1635 = vshrl.u32 %v1634, 7
    %v1636 = vsub.s32 %v1593, %v1635
    %v1637 = vrot.slane %v1368, %v1636
    %v1638 = vlaneseq
    %v1639 = vshrl.u32 %v1638, 7
    %v1640 = vsub.s32 %v1593, %v1639
    %v1641 = vrot.slane %v1371, %v1640
    %v1642 = vlaneseq
    %v1643 = vshrl.u32 %v1642, 7
    %v1644 = vsub.s32 %v1593, %v1643
    %v1645 = vrot.slane %v1374, %v1644
    %v1646 = vlaneseq
    %v1647 = vshrl.u32 %v1646, 7
    %v1648 = vsub.s32 %v1593, %v1647
    %v1649 = vrot.slane %v1377, %v1648
    %v1650 = vlaneseq
    %v1651 = vshrl.u32 %v1650, 7
    %v1652 = vsub.s32 %v1593, %v1651
    %v1653 = vrot.slane %v1380, %v1652
    %v1654 = vlaneseq
    %v1655 = vshrl.u32 %v1654, 7
    %v1656 = vsub.s32 %v1593, %v1655
    %v1657 = vrot.slane %v1383, %v1656
    %v1658 = vlaneseq
    %v1659 = vshrl.u32 %v1658, 7
    %v1660 = vsub.s32 %v1593, %v1659
    %v1661 = vrot.slane %v1386, %v1660
    %v1662 = vlaneseq
    %v1663 = vshrl.u32 %v1662, 7
    %v1664 = vsub.s32 %v1593, %v1663
    %v1665 = vrot.slane %v1389, %v1664
    %v1666 = vlaneseq
    %v1667 = vshrl.u32 %v1666, 7
    %v1668 = vsub.s32 %v1593, %v1667
    %v1669 = vrot.slane %v1392, %v1668
    %v1670 = vlaneseq
    %v1671 = vshrl.u32 %v1670, 7
    %v1672 = vsub.s32 %v1593, %v1671
    %v1673 = vrot.slane %v1395, %v1672
    %v1674 = vlaneseq
    %v1675 = vshrl.u32 %v1674, 7
    %v1676 = vsub.s32 %v1593, %v1675
    %v1677 = vrot.slane %v1398, %v1676
    %v1678 = vlaneseq
    %v1679 = vshrl.u32 %v1678, 7
    %v1680 = vsub.s32 %v1593, %v1679
    %v1681 = vrot.slane %v1401, %v1680
    %v1682 = vlaneseq
    %v1683 = vshrl.u32 %v1682, 7
    %v1684 = vsub.s32 %v1593, %v1683
    %v1685 = vrot.slane %v1404, %v1684
    %v1686 = vlaneseq
    %v1687 = vshrl.u32 %v1686, 7
    %v1688 = vsub.s32 %v1593, %v1687
    %v1689 = vrot.slane %v1407, %v1688
    %v1690 = vlaneseq
    %v1691 = vshrl.u32 %v1690, 7
    %v1692 = vsub.s32 %v1593, %v1691
    %v1693 = vrot.slane %v1410, %v1692
    %v1694 = vlaneseq
    %v1695 = vshrl.u32 %v1694, 7
    %v1696 = vsub.s32 %v1593, %v1695
    %v1697 = vrot.slane %v1413, %v1696
    %v1698 = vlaneseq
    %v1699 = vshrl.u32 %v1698, 7
    %v1700 = vsub.s32 %v1593, %v1699
    %v1701 = vrot.slane %v1416, %v1700
    %v1702 = vlaneseq
    %v1703 = vshrl.u32 %v1702, 7
    %v1704 = vsub.s32 %v1593, %v1703
    %v1705 = vrot.slane %v1419, %v1704
    %v1706 = vlaneseq
    %v1707 = vshrl.u32 %v1706, 7
    %v1708 = vsub.s32 %v1593, %v1707
    %v1709 = vrot.slane %v1422, %v1708
    %v1710 = vlaneseq
    %v1711 = vshrl.u32 %v1710, 7
    %v1712 = vsub.s32 %v1593, %v1711
    %v1713 = vrot.slane %v1425, %v1712
    %v1714 = vlaneseq
    %v1715 = vshrl.u32 %v1714, 7
    %v1716 = vsub.s32 %v1593, %v1715
    %v1717 = vrot.slane %v1428, %v1716
    %v1718 = vlaneseq
    %v1719 = vshrl.u32 %v1718, 7
    %v1720 = vsub.s32 %v1593, %v1719
    %v1721 = vrot.slane %v1431, %v1720
    %v1722 = vlaneseq
    %v1723 = vshrl.u32 %v1722, 7
    %v1724 = vsub.s32 %v1593, %v1723
    %v1725 = vrot.slane %v1434, %v1724
    %v1726 = vlaneseq
    %v1727 = vshrl.u32 %v1726, 7
    %v1728 = vsub.s32 %v1593, %v1727
    %v1729 = vrot.slane %v1437, %v1728
    %v1730 = vlaneseq
    %v1731 = vshrl.u32 %v1730, 7
    %v1732 = vsub.s32 %v1593, %v1731
    %v1733 = vrot.slane %v1440, %v1732
    %v1734 = vlaneseq
    %v1735 = vshrl.u32 %v1734, 7
    %v1736 = vsub.s32 %v1593, %v1735
    %v1737 = vrot.slane %v1443, %v1736
    %v1738 = vlaneseq
    %v1739 = vshrl.u32 %v1738, 7
    %v1740 = vsub.s32 %v1593, %v1739
    %v1741 = vrot.slane %v1446, %v1740
    %v1742 = vlaneseq
    %v1743 = vshrl.u32 %v1742, 7
    %v1744 = vsub.s32 %v1593, %v1743
    %v1745 = vrot.slane %v1449, %v1744
    %v1746 = vlaneseq
    %v1747 = vshrl.u32 %v1746, 7
    %v1748 = vsub.s32 %v1593, %v1747
    %v1749 = vrot.slane %v1452, %v1748
    %v1750 = vlaneseq
    %v1751 = vshrl.u32 %v1750, 7
    %v1752 = vsub.s32 %v1593, %v1751
    %v1753 = vrot.slane %v1455, %v1752
    %v1754 = vlaneseq
    %v1755 = vshrl.u32 %v1754, 7
    %v1756 = vsub.s32 %v1593, %v1755
    %v1757 = vrot.slane %v1458, %v1756
    %v1758 = vlaneseq
    %v1759 = vshrl.u32 %v1758, 7
    %v1760 = vsub.s32 %v1593, %v1759
    %v1761 = vrot.slane %v1461, %v1760
    %v1762 = vlaneseq
    %v1763 = vshrl.u32 %v1762, 7
    %v1764 = vsub.s32 %v1593, %v1763
    %v1765 = vrot.slane %v1464, %v1764
    %v1766 = vlaneseq
    %v1767 = vshrl.u32 %v1766, 7
    %v1768 = vsub.s32 %v1593, %v1767
    %v1769 = vrot.slane %v1467, %v1768
    %v1770 = vlaneseq
    %v1771 = vshrl.u32 %v1770, 7
    %v1772 = vsub.s32 %v1593, %v1771
    %v1773 = vrot.slane %v1470, %v1772
    %v1774 = vlaneseq
    %v1775 = vshrl.u32 %v1774, 7
    %v1776 = vsub.s32 %v1593, %v1775
    %v1777 = vrot.slane %v1473, %v1776
    %v1778 = vlaneseq
    %v1779 = vshrl.u32 %v1778, 7
    %v1780 = vsub.s32 %v1593, %v1779
    %v1781 = vrot.slane %v1476, %v1780
    %v1782 = vlaneseq
    %v1783 = vshrl.u32 %v1782, 7
    %v1784 = vsub.s32 %v1593, %v1783
    %v1785 = vrot.slane %v1479, %v1784
    %v1786 = vlaneseq
    %v1787 = vshrl.u32 %v1786, 7
    %v1788 = vsub.s32 %v1593, %v1787
    %v1789 = vrot.slane %v1482, %v1788
    %v1790 = vlaneseq
    %v1791 = vshrl.u32 %v1790, 7
    %v1792 = vsub.s32 %v1593, %v1791
    %v1793 = vrot.slane %v1485, %v1792
    %v1794 = vlaneseq
    %v1795 = vshrl.u32 %v1794, 7
    %v1796 = vsub.s32 %v1593, %v1795
    %v1797 = vrot.slane %v1488, %v1796
    %v1798 = vlaneseq
    %v1799 = vshrl.u32 %v1798, 7
    %v1800 = vsub.s32 %v1593, %v1799
    %v1801 = vrot.slane %v1491, %v1800
    %v1802 = vlaneseq
    %v1803 = vshrl.u32 %v1802, 7
    %v1804 = vsub.s32 %v1593, %v1803
    %v1805 = vrot.slane %v1494, %v1804
    %v1806 = vlaneseq
    %v1807 = vshrl.u32 %v1806, 7
    %v1808 = vsub.s32 %v1593, %v1807
    %v1809 = vrot.slane %v1497, %v1808
    %v1810 = vlaneseq
    %v1811 = vshrl.u32 %v1810, 7
    %v1812 = vsub.s32 %v1593, %v1811
    %v1813 = vrot.slane %v1500, %v1812
    %v1814 = vlaneseq
    %v1815 = vshrl.u32 %v1814, 7
    %v1816 = vsub.s32 %v1593, %v1815
    %v1817 = vrot.slane %v1503, %v1816
    %v1818 = vlaneseq
    %v1819 = vshrl.u32 %v1818, 7
    %v1820 = vsub.s32 %v1593, %v1819
    %v1821 = vrot.slane %v1506, %v1820
    %v1822 = vlaneseq
    %v1823 = vshrl.u32 %v1822, 7
    %v1824 = vsub.s32 %v1593, %v1823
    %v1825 = vrot.slane %v1509, %v1824
    %v1826 = vlaneseq
    %v1827 = vshrl.u32 %v1826, 7
    %v1828 = vsub.s32 %v1593, %v1827
    %v1829 = vrot.slane %v1512, %v1828
    %v1830 = vlaneseq
    %v1831 = vshrl.u32 %v1830, 7
    %v1832 = vsub.s32 %v1593, %v1831
    %v1833 = vrot.slane %v1515, %v1832
    %v1834 = vlaneseq
    %v1835 = vshrl.u32 %v1834, 7
    %v1836 = vsub.s32 %v1593, %v1835
    %v1837 = vrot.slane %v1518, %v1836
    %v1838 = vlaneseq
    %v1839 = vshrl.u32 %v1838, 7
    %v1840 = vsub.s32 %v1593, %v1839
    %v1841 = vrot.slane %v1521, %v1840
    %v1842 = vlaneseq
    %v1843 = vshrl.u32 %v1842, 7
    %v1844 = vsub.s32 %v1593, %v1843
    %v1845 = vrot.slane %v1524, %v1844
    %v1846 = vlaneseq
    %v1847 = vshrl.u32 %v1846, 7
    %v1848 = vsub.s32 %v1593, %v1847
    %v1849 = vrot.slane %v1527, %v1848
    %vm1850 = vcmask 1041409
    %v1851 = vsel %vm1850, %v1601, %v1597
    %vm1852 = vcmask 1042434
    %v1853 = vsel %vm1852, %v1605, %v1851
    %vm1854 = vcmask 1043459
    %v1855 = vsel %vm1854, %v1609, %v1853
    %vm1856 = vcmask 1044484
    %v1857 = vsel %vm1856, %v1613, %v1855
    %vm1858 = vcmask 1045509
    %v1859 = vsel %vm1858, %v1617, %v1857
    %vm1860 = vcmask 1046534
    %v1861 = vsel %vm1860, %v1621, %v1859
    %vm1862 = vcmask 1047559
    %v1863 = vsel %vm1862, %v1625, %v1861
    %v1864 = vsel %vm1850, %v1633, %v1629
    %v1865 = vsel %vm1852, %v1637, %v1864
    %v1866 = vsel %vm1854, %v1641, %v1865
    %v1867 = vsel %vm1856, %v1645, %v1866
    %v1868 = vsel %vm1858, %v1649, %v1867
    %v1869 = vsel %vm1860, %v1653, %v1868
    %v1870 = vsel %vm1862, %v1657, %v1869
    %v1871 = vsel %vm1850, %v1665, %v1661
    %v1872 = vsel %vm1852, %v1669, %v1871
    %v1873 = vsel %vm1854, %v1673, %v1872
    %v1874 = vsel %vm1856, %v1677, %v1873
    %v1875 = vsel %vm1858, %v1681, %v1874
    %v1876 = vsel %vm1860, %v1685, %v1875
    %v1877 = vsel %vm1862, %v1689, %v1876
    %v1878 = vsel %vm1850, %v1697, %v1693
    %v1879 = vsel %vm1852, %v1701, %v1878
    %v1880 = vsel %vm1854, %v1705, %v1879
    %v1881 = vsel %vm1856, %v1709, %v1880
    %v1882 = vsel %vm1858, %v1713, %v1881
    %v1883 = vsel %vm1860, %v1717, %v1882
    %v1884 = vsel %vm1862, %v1721, %v1883
    %v1885 = vsel %vm1850, %v1729, %v1725
    %v1886 = vsel %vm1852, %v1733, %v1885
    %v1887 = vsel %vm1854, %v1737, %v1886
    %v1888 = vsel %vm1856, %v1741, %v1887
    %v1889 = vsel %vm1858, %v1745, %v1888
    %v1890 = vsel %vm1860, %v1749, %v1889
    %v1891 = vsel %vm1862, %v1753, %v1890
    %v1892 = vsel %vm1850, %v1761, %v1757
    %v1893 = vsel %vm1852, %v1765, %v1892
    %v1894 = vsel %vm1854, %v1769, %v1893
    %v1895 = vsel %vm1856, %v1773, %v1894
    %v1896 = vsel %vm1858, %v1777, %v1895
    %v1897 = vsel %vm1860, %v1781, %v1896
    %v1898 = vsel %vm1862, %v1785, %v1897
    %v1899 = vsel %vm1850, %v1793, %v1789
    %v1900 = vsel %vm1852, %v1797, %v1899
    %v1901 = vsel %vm1854, %v1801, %v1900
    %v1902 = vsel %vm1856, %v1805, %v1901
    %v1903 = vsel %vm1858, %v1809, %v1902
    %v1904 = vsel %vm1860, %v1813, %v1903
    %v1905 = vsel %vm1862, %v1817, %v1904
    %v1906 = vsel %vm1850, %v1825, %v1821
    %v1907 = vsel %vm1852, %v1829, %v1906
    %v1908 = vsel %vm1854, %v1833, %v1907
    %v1909 = vsel %vm1856, %v1837, %v1908
    %v1910 = vsel %vm1858, %v1841, %v1909
    %v1911 = vsel %vm1860, %v1845, %v1910
    %v1912 = vsel %vm1862, %v1849, %v1911
    %vm1921 = vcmask 64512
    %1922 = vst.msk [vmem:[#allocation5] sm:$0xff] %vm1921, %v1863
    %1923 = vst.msk [vmem:[#allocation5 + $0x8] sm:$0xff] %vm1921, %v1870
    %1924 = vst.msk [vmem:[#allocation5 + $0x10] sm:$0xff] %vm1921, %v1877
    %1925 = vst.msk [vmem:[#allocation5 + $0x18] sm:$0xff] %vm1921, %v1884
    %1926 = vst.msk [vmem:[#allocation5 + $0x20] sm:$0xff] %vm1921, %v1891
    %1927 = vst.msk [vmem:[#allocation5 + $0x28] sm:$0xff] %vm1921, %v1898
    %1928 = vst.msk [vmem:[#allocation5 + $0x30] sm:$0xff] %vm1921, %v1905
    %1929 = vst.msk [vmem:[#allocation5 + $0x38] sm:$0xff] %vm1921, %v1912
    // Predicated region
    $region10: #{tpu_custom_call.1} parent=1 // pred_check
      _
    $region11: #{tpu_custom_call.1} parent=1 // pred_check_branch
      %1931 = sbr.rel (0) target = $region13
    $region12: #{tpu_custom_call.1} parent=1 // pred_region
      %s1933 = ssub.s32 1024, 1024
      %1934 = vsyncadd [#allocation4], %s1933
      %s1935 = sshll.u32 [#allocation5], 4
      %s1936 = int_to_ptr.vmem [resolvable:$true] %s1935
      %1941 = dma.vmem_to_hbm [thread:$0]  %s1936, 1024, %s1, [#allocation4], 128, 128, 8
    $region13: #{tpu_custom_call.1} parent=1 // pred_fallthru
      _
    // Predicated region
    $region14: #{tpu_custom_call.1} parent=1 // pred_check
      _
    $region15: #{tpu_custom_call.1} parent=1 // pred_check_branch
      %1943 = sbr.rel (0) target = $region17
    $region16: #{tpu_custom_call.1} parent=1 // pred_region
      %1944 = dma.done [#allocation4], 1024
    $region17: #{tpu_custom_call.1} parent=1 // pred_fallthru
      _
    %1945 = vsyncpa [#allocation3], 1
    %1946 = vsyncpa [#allocation4], 1

</llo_original>
